<compile_context>
chip_gen: v6e
topology: v6e:2x2x1
jax: 0.10.0
libtpu: 0.0.40
codegen_flags: <defaults>
</compile_context>

<pallas_src>
import functools

import jax
import jax.numpy as jnp
from jax import lax
from jax.experimental import pallas as pl
from jax.experimental.pallas import tpu as pltpu

NEG_SLOPE = 0.2      # LeakyReLU slope (module default relu=0.2)
EPS = 1e-5           # BatchNorm eps (PyTorch default)
LANE = 128
SUBLANE = 8

_CPARAMS = pltpu.CompilerParams(
    dimension_semantics=("parallel",),          # pixel tiles are independent
    vmem_limit_bytes=32 * 1024 * 1024,
)


def _round_up(x, m):
    return (x + m - 1) // m * m


def _leaky(x):
    return jnp.where(x > 0, x, NEG_SLOPE * x)


# --------------------------------------------------------------------------
# Pallas kernels
# --------------------------------------------------------------------------
def _tile_stats(a, tile_p, p_valid):
    """Per-channel sum / sum-of-squares over the valid rows of this tile."""
    row = pl.program_id(0) * tile_p + lax.broadcasted_iota(
        jnp.int32, (tile_p, 1), 0)
    am = jnp.where(row < p_valid, a, 0.0)
    s = jnp.sum(am, axis=0, keepdims=True)           # (1, Cpad)
    sq = jnp.sum(am * am, axis=0, keepdims=True)      # (1, Cpad)
    return s, sq


def _conv_act_stats_kernel(cols_ref, w_ref, b_ref,
                           act_ref, sum_ref, sq_ref, *, tile_p, p_valid):
    """conv1 (bf16 im2col matmul) + bias + LeakyReLU + per-tile BN stats."""
    y = jnp.dot(cols_ref[...], w_ref[...], preferred_element_type=jnp.float32)
    a = _leaky(y + b_ref[...])
    act_ref[...] = a
    s, sq = _tile_stats(a, tile_p, p_valid)
    sum_ref[...] = s[None]
    sq_ref[...] = sq[None]


def _conv_res_proj_kernel(cols_ref, w_ref, b_ref, xs_ref, ws_ref, bs_ref,
                          act_ref, sum_ref, sq_ref, *, tile_p, p_valid):
    """conv2 + 1x1 projection shortcut + residual add + LeakyReLU + BN stats."""
    y = jnp.dot(cols_ref[...], w_ref[...], preferred_element_type=jnp.float32)
    y = y + b_ref[...]
    sc = jnp.dot(xs_ref[...], ws_ref[...], preferred_element_type=jnp.float32)
    sc = sc + bs_ref[...]
    a = _leaky(y + sc)
    act_ref[...] = a
    s, sq = _tile_stats(a, tile_p, p_valid)
    sum_ref[...] = s[None]
    sq_ref[...] = sq[None]


def _conv_res_id_kernel(cols_ref, w_ref, b_ref, xs_ref,
                        act_ref, sum_ref, sq_ref, *, tile_p, p_valid):
    """conv2 + identity shortcut (no projection matmul) + LeakyReLU + stats."""
    y = jnp.dot(cols_ref[...], w_ref[...], preferred_element_type=jnp.float32)
    a = _leaky(y + b_ref[...] + xs_ref[...])
    act_ref[...] = a
    s, sq = _tile_stats(a, tile_p, p_valid)
    sum_ref[...] = s[None]
    sq_ref[...] = sq[None]


def _bn_affine_kernel(act_ref, scale_ref, shift_ref, out_ref):
    """BatchNorm pass 2: per-channel affine normalisation of one pixel tile."""
    out_ref[...] = (act_ref[...] * scale_ref[...]
                    + shift_ref[...]).astype(out_ref.dtype)


# --------------------------------------------------------------------------
# BlockSpec helpers / pallas_call wrappers
# --------------------------------------------------------------------------
def _row_spec(tile_p, width):          # pixel-tiled operand
    return pl.BlockSpec((tile_p, width), lambda i: (i, 0))


def _full_spec(rows, cols):            # weight pinned across the grid
    return pl.BlockSpec((rows, cols), lambda i: (0, 0))


def _pinned_spec(width):               # bias / scale / shift pinned
    return pl.BlockSpec((1, width), lambda i: (0, 0))


def _stats_spec(cpad):                 # per-tile stats rows
    return pl.BlockSpec((1, 1, cpad), lambda i: (i, 0, 0))


def _call_conv(kernel, inputs, *, in_specs, tile_p, p_valid, cpad, ppad, nt):
    kern = functools.partial(kernel, tile_p=tile_p, p_valid=p_valid)
    return pl.pallas_call(
        kern,
        grid=(nt,),
        in_specs=in_specs,
        out_specs=[
            _row_spec(tile_p, cpad),
            _stats_spec(cpad),
            _stats_spec(cpad),
        ],
        out_shape=[
            jax.ShapeDtypeStruct((ppad, cpad), jnp.float32),   # activations
            jax.ShapeDtypeStruct((nt, 1, cpad), jnp.float32),  # per-tile sum
            jax.ShapeDtypeStruct((nt, 1, cpad), jnp.float32),  # per-tile sumsq
        ],
        compiler_params=_CPARAMS,
    )(*inputs)


def _bn_affine(act, scale, shift, *, tile_p, out_dtype):
    ppad, cpad = act.shape
    nt = ppad // tile_p
    return pl.pallas_call(
        _bn_affine_kernel,
        grid=(nt,),
        in_specs=[_row_spec(tile_p, cpad), _pinned_spec(cpad),
                  _pinned_spec(cpad)],
        out_specs=_row_spec(tile_p, cpad),
        out_shape=jax.ShapeDtypeStruct((ppad, cpad), out_dtype),
        compiler_params=_CPARAMS,
    )(act, scale, shift)


def _bn_scale_shift(sums, sqs, gamma, beta, p_valid):
    """Reduce per-tile stats -> BatchNorm scale/shift (training-mode stats)."""
    ssum = jnp.sum(sums[:, 0, :], axis=0)
    ssq = jnp.sum(sqs[:, 0, :], axis=0)
    mean = ssum / p_valid
    var = jnp.maximum(ssq / p_valid - mean * mean, 0.0)   # biased variance
    scale = gamma * lax.rsqrt(var + EPS)
    shift = beta - mean * scale
    return scale[None, :], shift[None, :]


# --------------------------------------------------------------------------
# JAX glue
# --------------------------------------------------------------------------
def _im2col_3x3(x_nhwc):
    """3x3 / pad=1 / stride=1 im2col -> (N*H*W, 9*C), tap-major / chan-minor."""
    N, H, W, C = x_nhwc.shape
    xp = jnp.pad(x_nhwc, ((0, 0), (1, 1), (1, 1), (0, 0)))
    patches = [xp[:, dy:dy + H, dx:dx + W, :]
               for dy in range(3) for dx in range(3)]
    return jnp.concatenate(patches, axis=-1).reshape(N * H * W, 9 * C)


def _pad2(a, rows, cols):
    return jnp.pad(a, ((0, rows - a.shape[0]), (0, cols - a.shape[1])))


def init_params(key, in_channels, out_channels):
    """Deterministic synthetic parameters (Conv2d / BatchNorm2d shapes)."""
    k1, k2, k3, k4, k5, k6 = jax.random.split(key, 6)
    w1 = 0.05 * jax.random.normal(k1, (3, 3, in_channels, out_channels), jnp.float32)
    b1 = 0.05 * jax.random.normal(k2, (out_channels,), jnp.float32)
    w2 = 0.05 * jax.random.normal(k3, (3, 3, out_channels, out_channels), jnp.float32)
    b2 = 0.05 * jax.random.normal(k4, (out_channels,), jnp.float32)
    if in_channels != out_channels:
        ws = 0.05 * jax.random.normal(k5, (in_channels, out_channels), jnp.float32)
        bs = 0.05 * jax.random.normal(k6, (out_channels,), jnp.float32)
    else:
        ws, bs = None, None   # identity shortcut: no projection
    ones = jnp.ones((out_channels,), jnp.float32)
    zeros = jnp.zeros((out_channels,), jnp.float32)
    return dict(w1=w1, b1=b1, w2=w2, b2=b2, ws=ws, bs=bs,
                g1=ones, beta1=zeros, g2=ones, beta2=zeros)


def residual_block_forward(x_nchw, params, *, tile_p=512):
    """Forward pass. Input/output are NCHW like the PyTorch module."""
    N, Cin, H, W = x_nchw.shape
    Cout = params["b1"].shape[0]
    P = N * H * W

    cpad = _round_up(Cout, LANE)
    k1p = _round_up(9 * Cin, LANE)
    k2p = _round_up(9 * Cout, LANE)

    tile_p = max(SUBLANE, min(_round_up(tile_p, SUBLANE), _round_up(P, SUBLANE)))
    nt = pl.cdiv(P, tile_p)
    ppad = nt * tile_p

    x = jnp.transpose(x_nchw, (0, 2, 3, 1)).astype(jnp.float32)   # -> NHWC

    # Lane-dense (128-padded) weights / BN params; bf16 for the MXU matmuls.
    w1m = _pad2(params["w1"].reshape(9 * Cin, Cout), k1p, cpad).astype(jnp.bfloat16)
    w2m = _pad2(params["w2"].reshape(9 * Cout, Cout), k2p, cpad).astype(jnp.bfloat16)
    b1p = _pad2(params["b1"][None, :], 1, cpad)
    b2p = _pad2(params["b2"][None, :], 1, cpad)
    g1p = jnp.pad(params["g1"], (0, cpad - Cout))
    be1p = jnp.pad(params["beta1"], (0, cpad - Cout))
    g2p = jnp.pad(params["g2"], (0, cpad - Cout))
    be2p = jnp.pad(params["beta2"], (0, cpad - Cout))

    # ---- pass 1a: conv1 + bias + LeakyReLU + BN1 statistics (tiled) --------
    cols1 = _pad2(_im2col_3x3(x), ppad, k1p).astype(jnp.bfloat16)
    act1, sum1, sq1 = _call_conv(
        _conv_act_stats_kernel, (cols1, w1m, b1p),
        in_specs=[_row_spec(tile_p, k1p), _full_spec(k1p, cpad),
                  _pinned_spec(cpad)],
        tile_p=tile_p, p_valid=P, cpad=cpad, ppad=ppad, nt=nt)
    scale1, shift1 = _bn_scale_shift(sum1, sq1, g1p, be1p, P)
    # BN1 normalise; emit bf16 directly (it only feeds the bf16 conv2 matmul).
    y1n = _bn_affine(act1, scale1, shift1, tile_p=tile_p, out_dtype=jnp.bfloat16)

    # ---- pass 2a: conv2 + shortcut + add + LeakyReLU + BN2 statistics ------
    cols2 = _pad2(_im2col_3x3(y1n[:P, :Cout].reshape(N, H, W, Cout)),
                  ppad, k2p).astype(jnp.bfloat16)

    if params["ws"] is not None:
        cinp = _round_up(Cin, LANE)
        xs = _pad2(x.reshape(P, Cin), ppad, cinp).astype(jnp.bfloat16)
        wsm = _pad2(params["ws"], cinp, cpad).astype(jnp.bfloat16)
        bsp = _pad2(params["bs"][None, :], 1, cpad)
        act2, sum2, sq2 = _call_conv(
            _conv_res_proj_kernel, (cols2, w2m, b2p, xs, wsm, bsp),
            in_specs=[_row_spec(tile_p, k2p), _full_spec(k2p, cpad),
                      _pinned_spec(cpad), _row_spec(tile_p, cinp),
                      _full_spec(cinp, cpad), _pinned_spec(cpad)],
            tile_p=tile_p, p_valid=P, cpad=cpad, ppad=ppad, nt=nt)
    else:
        # identity shortcut: add x directly, no projection matmul / eye trick.
        xs = _pad2(x.reshape(P, Cin), ppad, cpad)     # f32 residual stream
        act2, sum2, sq2 = _call_conv(
            _conv_res_id_kernel, (cols2, w2m, b2p, xs),
            in_specs=[_row_spec(tile_p, k2p), _full_spec(k2p, cpad),
                      _pinned_spec(cpad), _row_spec(tile_p, cpad)],
            tile_p=tile_p, p_valid=P, cpad=cpad, ppad=ppad, nt=nt)

    scale2, shift2 = _bn_scale_shift(sum2, sq2, g2p, be2p, P)
    y2 = _bn_affine(act2, scale2, shift2, tile_p=tile_p, out_dtype=jnp.float32)

    out = y2[:P, :Cout].reshape(N, H, W, Cout)
    return jnp.transpose(out, (0, 3, 1, 2))           # -> NCHW


# --------------------------------------------------------------------------
# Pure-JAX reference (for correctness checking only)
# --------------------------------------------------------------------------
def _ref_forward(x_nchw, params):
    def conv3x3(x, w, b):
        w_oihw = jnp.transpose(w, (3, 2, 0, 1))
        y = lax.conv_general_dilated(
            x, w_oihw, (1, 1), ((1, 1), (1, 1)),
            dimension_numbers=("NCHW", "OIHW", "NCHW"))
        return y + b[None, :, None, None]

    def bn(x, g, b):
        m = jnp.mean(x, axis=(0, 2, 3), keepdims=True)
        v = jnp.mean((x - m) ** 2, axis=(0, 2, 3), keepdims=True)
        return ((x - m) * lax.rsqrt(v + EPS) * g[None, :, None, None]
                + b[None, :, None, None])

    x1 = bn(_leaky(conv3x3(x_nchw, params["w1"], params["b1"])),
            params["g1"], params["beta1"])
    x1 = conv3x3(x1, params["w2"], params["b2"])
    if params["ws"] is not None:
        w_oihw = params["ws"].T[:, :, None, None]
        x2 = lax.conv_general_dilated(
            x_nchw, w_oihw, (1, 1), ((0, 0), (0, 0)),
            dimension_numbers=("NCHW", "OIHW", "NCHW"))
        x2 = x2 + params["bs"][None, :, None, None]
    else:
        x2 = x_nchw
    return bn(_leaky(x1 + x2), params["g2"], params["beta2"])


# --------------------------------------------------------------------------
if __name__ == "__main__":
    key = jax.random.PRNGKey(0)
    k_x, k_p = jax.random.split(key)

    N, Cin, Cout, H, W = 2, 4, 8, 16, 16     # Cin != Cout -> projection shortcut
    x = jax.random.normal(k_x, (N, Cin, H, W), jnp.float32)
    params = init_params(k_p, Cin, Cout)

    # tile_p=128 -> 4 pixel tiles: exercises the grid + cross-tile BN reduction.
    fwd = jax.jit(functools.partial(residual_block_forward, tile_p=128))
    out = jax.block_until_ready(fwd(x, params))

    assert out.shape == (N, Cout, H, W)
    assert jnp.isfinite(out).all()

    ref = _ref_forward(x, params)
    max_err = float(jnp.max(jnp.abs(out - ref)))
    assert max_err < 0.1, f"max abs err vs reference: {max_err}"
    print("KERNEL_OK")
</pallas_src>

<mosaic_0001>
module attributes {stable_mosaic.version = 11 : i64} {
  func.func @_conv_act_stats_kernel(%arg0: i32, %arg1: memref<128x128xbf16, #tpu.memory_space<vmem>>, %arg2: memref<128x128xbf16, #tpu.memory_space<vmem>>, %arg3: memref<1x128xf32, #tpu.memory_space<vmem>>, %arg4: memref<128x128xf32, #tpu.memory_space<vmem>>, %arg5: memref<1x1x128xf32, #tpu.memory_space<vmem>>, %arg6: memref<1x1x128xf32, #tpu.memory_space<vmem>>) attributes {dimension_semantics = [#tpu.dimension_semantics<parallel>], iteration_bounds = array<i64: 4>, scalar_prefetch = 0 : i64, scratch_operands = 0 : i64, tpu.core_type = #tpu.core_type<tc>, window_params = [{transform_indices = @transform_0, window_bounds = array<i64: 128, 128>}, {pipeline_mode = #tpu.pipeline_mode<synchronous>, transform_indices = @transform_1, window_bounds = array<i64: 128, 128>}, {pipeline_mode = #tpu.pipeline_mode<synchronous>, transform_indices = @transform_2, window_bounds = array<i64: 1, 128>}, {transform_indices = @transform_3, window_bounds = array<i64: 128, 128>}, {transform_indices = @transform_4, window_bounds = array<i64: 1, 1, 128>}, {transform_indices = @transform_5, window_bounds = array<i64: 1, 1, 128>}]} {
    %c0 = arith.constant 0 : index
    %c0_0 = arith.constant 0 : index
    %0 = vector.load %arg1[%c0, %c0_0] : memref<128x128xbf16, #tpu.memory_space<vmem>>, vector<128x128xbf16>
    %c0_1 = arith.constant 0 : index
    %c0_2 = arith.constant 0 : index
    %1 = vector.load %arg2[%c0_1, %c0_2] : memref<128x128xbf16, #tpu.memory_space<vmem>>, vector<128x128xbf16>
    %cst = arith.constant dense<0.000000e+00> : vector<128x128xf32>
    %2 = tpu.matmul %0, %1, %cst {dimension_numbers = #tpu.dot_dimension_numbers<[1], [0], [0], [1], [0, 0, 1, 1], [], []>} : vector<128x128xbf16>, vector<128x128xbf16>, vector<128x128xf32> -> vector<128x128xf32>
    %c0_3 = arith.constant 0 : index
    %c0_4 = arith.constant 0 : index
    %3 = vector.load %arg3[%c0_3, %c0_4] : memref<1x128xf32, #tpu.memory_space<vmem>>, vector<1x128xf32>
    %4 = vector.broadcast %3 : vector<1x128xf32> to vector<128x128xf32>
    %5 = arith.addf %2, %4 : vector<128x128xf32>
    %cst_5 = arith.constant 0.000000e+00 : f32
    %6 = vector.broadcast %cst_5 : f32 to vector<128x128xf32>
    %7 = arith.cmpf ogt, %5, %6 : vector<128x128xf32>
    %cst_6 = arith.constant 2.000000e-01 : f32
    %8 = vector.broadcast %cst_6 : f32 to vector<128x128xf32>
    %9 = arith.mulf %8, %5 : vector<128x128xf32>
    %10 = arith.select %7, %5, %9 : vector<128x128xi1>, vector<128x128xf32>
    %c0_7 = arith.constant 0 : index
    %c0_8 = arith.constant 0 : index
    %11 = vector.load %arg4[%c0_7, %c0_8] : memref<128x128xf32, #tpu.memory_space<vmem>>, vector<128x128xf32>
    tpu.vector_store %arg4[%c0_7, %c0_8], %10 {strides = array<i32>} : memref<128x128xf32, #tpu.memory_space<vmem>>, vector<128x128xf32>,
    %c128_i32 = arith.constant 128 : i32
    %12 = arith.muli %arg0, %c128_i32 : i32
    %13 = tpu.iota {dimensions = array<i32: 0>} : vector<128x1xi32>
    %14 = vector.broadcast %12 : i32 to vector<128x1xi32>
    %15 = arith.addi %14, %13 : vector<128x1xi32>
    %c512_i32 = arith.constant 512 : i32
    %16 = vector.broadcast %c512_i32 : i32 to vector<128x1xi32>
    %17 = arith.cmpi slt, %15, %16 : vector<128x1xi32>
    %cst_9 = arith.constant 0.000000e+00 : f32
    %18 = vector.shape_cast %17 : vector<128x1xi1> to vector<128x1xi1>
    %19 = vector.broadcast %18 : vector<128x1xi1> to vector<128x128xi1>
    %20 = vector.broadcast %cst_9 : f32 to vector<128x128xf32>
    %21 = arith.select %19, %10, %20 : vector<128x128xi1>, vector<128x128xf32>
    %cst_10 = arith.constant dense<0.000000e+00> : vector<128xf32>
    %22 = vector.multi_reduction <add>, %21, %cst_10 [0] : vector<128x128xf32> to vector<128xf32>
    %23 = vector.shape_cast %22 : vector<128xf32> to vector<1x128xf32>
    %24 = arith.mulf %21, %21 : vector<128x128xf32>
    %cst_11 = arith.constant dense<0.000000e+00> : vector<128xf32>
    %25 = vector.multi_reduction <add>, %24, %cst_11 [0] : vector<128x128xf32> to vector<128xf32>
    %26 = vector.shape_cast %25 : vector<128xf32> to vector<1x128xf32>
    %27 = vector.shape_cast %23 : vector<1x128xf32> to vector<1x1x128xf32>
    %c0_12 = arith.constant 0 : index
    %c0_13 = arith.constant 0 : index
    %c0_14 = arith.constant 0 : index
    %28 = vector.load %arg5[%c0_12, %c0_13, %c0_14] : memref<1x1x128xf32, #tpu.memory_space<vmem>>, vector<1x1x128xf32>
    tpu.vector_store %arg5[%c0_12, %c0_13, %c0_14], %27 {strides = array<i32>} : memref<1x1x128xf32, #tpu.memory_space<vmem>>, vector<1x1x128xf32>,
    %29 = vector.shape_cast %26 : vector<1x128xf32> to vector<1x1x128xf32>
    %c0_15 = arith.constant 0 : index
    %c0_16 = arith.constant 0 : index
    %c0_17 = arith.constant 0 : index
    %30 = vector.load %arg6[%c0_15, %c0_16, %c0_17] : memref<1x1x128xf32, #tpu.memory_space<vmem>>, vector<1x1x128xf32>
    tpu.vector_store %arg6[%c0_15, %c0_16, %c0_17], %29 {strides = array<i32>} : memref<1x1x128xf32, #tpu.memory_space<vmem>>, vector<1x1x128xf32>,
    return
  }
  func.func @transform_0(%arg0: i32) -> (i32, i32) {
    %c0_i32 = arith.constant 0 : i32
    %c0_i32_0 = arith.constant 0 : i32
    return %arg0, %c0_i32 : i32, i32
  }
  func.func @transform_1(%arg0: i32) -> (i32, i32) {
    %c0_i32 = arith.constant 0 : i32
    %c0_i32_0 = arith.constant 0 : i32
    %c0_i32_1 = arith.constant 0 : i32
    return %c0_i32, %c0_i32_0 : i32, i32
  }
  func.func @transform_2(%arg0: i32) -> (i32, i32) {
    %c0_i32 = arith.constant 0 : i32
    %c0_i32_0 = arith.constant 0 : i32
    %c0_i32_1 = arith.constant 0 : i32
    return %c0_i32, %c0_i32_0 : i32, i32
  }
  func.func @transform_3(%arg0: i32) -> (i32, i32) {
    %c0_i32 = arith.constant 0 : i32
    %c0_i32_0 = arith.constant 0 : i32
    return %arg0, %c0_i32 : i32, i32
  }
  func.func @transform_4(%arg0: i32) -> (i32, i32, i32) {
    %c0_i32 = arith.constant 0 : i32
    %c0_i32_0 = arith.constant 0 : i32
    %c0_i32_1 = arith.constant 0 : i32
    return %arg0, %c0_i32, %c0_i32_0 : i32, i32, i32
  }
  func.func @transform_5(%arg0: i32) -> (i32, i32, i32) {
    %c0_i32 = arith.constant 0 : i32
    %c0_i32_0 = arith.constant 0 : i32
    %c0_i32_1 = arith.constant 0 : i32
    return %arg0, %c0_i32, %c0_i32_0 : i32, i32, i32
  }
}

module attributes {stable_mosaic.version = 11 : i64} {
  func.func @_bn_affine_kernel(%arg0: i32, %arg1: memref<128x128xf32, #tpu.memory_space<vmem>>, %arg2: memref<1x128xf32, #tpu.memory_space<vmem>>, %arg3: memref<1x128xf32, #tpu.memory_space<vmem>>, %arg4: memref<128x128xbf16, #tpu.memory_space<vmem>>) attributes {dimension_semantics = [#tpu.dimension_semantics<parallel>], iteration_bounds = array<i64: 4>, scalar_prefetch = 0 : i64, scratch_operands = 0 : i64, tpu.core_type = #tpu.core_type<tc>, window_params = [{transform_indices = @transform_0, window_bounds = array<i64: 128, 128>}, {pipeline_mode = #tpu.pipeline_mode<synchronous>, transform_indices = @transform_1, window_bounds = array<i64: 1, 128>}, {pipeline_mode = #tpu.pipeline_mode<synchronous>, transform_indices = @transform_2, window_bounds = array<i64: 1, 128>}, {transform_indices = @transform_3, window_bounds = array<i64: 128, 128>}]} {
    %c0 = arith.constant 0 : index
    %c0_0 = arith.constant 0 : index
    %0 = vector.load %arg1[%c0, %c0_0] : memref<128x128xf32, #tpu.memory_space<vmem>>, vector<128x128xf32>
    %c0_1 = arith.constant 0 : index
    %c0_2 = arith.constant 0 : index
    %1 = vector.load %arg2[%c0_1, %c0_2] : memref<1x128xf32, #tpu.memory_space<vmem>>, vector<1x128xf32>
    %2 = vector.broadcast %1 : vector<1x128xf32> to vector<128x128xf32>
    %3 = arith.mulf %0, %2 : vector<128x128xf32>
    %c0_3 = arith.constant 0 : index
    %c0_4 = arith.constant 0 : index
    %4 = vector.load %arg3[%c0_3, %c0_4] : memref<1x128xf32, #tpu.memory_space<vmem>>, vector<1x128xf32>
    %5 = vector.broadcast %4 : vector<1x128xf32> to vector<128x128xf32>
    %6 = arith.addf %3, %5 : vector<128x128xf32>
    %7 = arith.truncf %6 : vector<128x128xf32> to vector<128x128xbf16>
    %c0_5 = arith.constant 0 : index
    %c0_6 = arith.constant 0 : index
    %8 = vector.load %arg4[%c0_5, %c0_6] : memref<128x128xbf16, #tpu.memory_space<vmem>>, vector<128x128xbf16>
    tpu.vector_store %arg4[%c0_5, %c0_6], %7 {strides = array<i32>} : memref<128x128xbf16, #tpu.memory_space<vmem>>, vector<128x128xbf16>,
    return
  }
  func.func @transform_0(%arg0: i32) -> (i32, i32) {
    %c0_i32 = arith.constant 0 : i32
    %c0_i32_0 = arith.constant 0 : i32
    return %arg0, %c0_i32 : i32, i32
  }
  func.func @transform_1(%arg0: i32) -> (i32, i32) {
    %c0_i32 = arith.constant 0 : i32
    %c0_i32_0 = arith.constant 0 : i32
    %c0_i32_1 = arith.constant 0 : i32
    return %c0_i32, %c0_i32_0 : i32, i32
  }
  func.func @transform_2(%arg0: i32) -> (i32, i32) {
    %c0_i32 = arith.constant 0 : i32
    %c0_i32_0 = arith.constant 0 : i32
    %c0_i32_1 = arith.constant 0 : i32
    return %c0_i32, %c0_i32_0 : i32, i32
  }
  func.func @transform_3(%arg0: i32) -> (i32, i32) {
    %c0_i32 = arith.constant 0 : i32
    %c0_i32_0 = arith.constant 0 : i32
    return %arg0, %c0_i32 : i32, i32
  }
}

module attributes {stable_mosaic.version = 11 : i64} {
  func.func @_conv_res_proj_kernel(%arg0: i32, %arg1: memref<128x128xbf16, #tpu.memory_space<vmem>>, %arg2: memref<128x128xbf16, #tpu.memory_space<vmem>>, %arg3: memref<1x128xf32, #tpu.memory_space<vmem>>, %arg4: memref<128x128xbf16, #tpu.memory_space<vmem>>, %arg5: memref<128x128xbf16, #tpu.memory_space<vmem>>, %arg6: memref<1x128xf32, #tpu.memory_space<vmem>>, %arg7: memref<128x128xf32, #tpu.memory_space<vmem>>, %arg8: memref<1x1x128xf32, #tpu.memory_space<vmem>>, %arg9: memref<1x1x128xf32, #tpu.memory_space<vmem>>) attributes {dimension_semantics = [#tpu.dimension_semantics<parallel>], iteration_bounds = array<i64: 4>, scalar_prefetch = 0 : i64, scratch_operands = 0 : i64, tpu.core_type = #tpu.core_type<tc>, window_params = [{transform_indices = @transform_0, window_bounds = array<i64: 128, 128>}, {pipeline_mode = #tpu.pipeline_mode<synchronous>, transform_indices = @transform_1, window_bounds = array<i64: 128, 128>}, {pipeline_mode = #tpu.pipeline_mode<synchronous>, transform_indices = @transform_2, window_bounds = array<i64: 1, 128>}, {transform_indices = @transform_3, window_bounds = array<i64: 128, 128>}, {pipeline_mode = #tpu.pipeline_mode<synchronous>, transform_indices = @transform_4, window_bounds = array<i64: 128, 128>}, {pipeline_mode = #tpu.pipeline_mode<synchronous>, transform_indices = @transform_5, window_bounds = array<i64: 1, 128>}, {transform_indices = @transform_6, window_bounds = array<i64: 128, 128>}, {transform_indices = @transform_7, window_bounds = array<i64: 1, 1, 128>}, {transform_indices = @transform_8, window_bounds = array<i64: 1, 1, 128>}]} {
    %c0 = arith.constant 0 : index
    %c0_0 = arith.constant 0 : index
    %0 = vector.load %arg1[%c0, %c0_0] : memref<128x128xbf16, #tpu.memory_space<vmem>>, vector<128x128xbf16>
    %c0_1 = arith.constant 0 : index
    %c0_2 = arith.constant 0 : index
    %1 = vector.load %arg2[%c0_1, %c0_2] : memref<128x128xbf16, #tpu.memory_space<vmem>>, vector<128x128xbf16>
    %cst = arith.constant dense<0.000000e+00> : vector<128x128xf32>
    %2 = tpu.matmul %0, %1, %cst {dimension_numbers = #tpu.dot_dimension_numbers<[1], [0], [0], [1], [0, 0, 1, 1], [], []>} : vector<128x128xbf16>, vector<128x128xbf16>, vector<128x128xf32> -> vector<128x128xf32>
    %c0_3 = arith.constant 0 : index
    %c0_4 = arith.constant 0 : index
    %3 = vector.load %arg3[%c0_3, %c0_4] : memref<1x128xf32, #tpu.memory_space<vmem>>, vector<1x128xf32>
    %4 = vector.broadcast %3 : vector<1x128xf32> to vector<128x128xf32>
    %5 = arith.addf %2, %4 : vector<128x128xf32>
    %c0_5 = arith.constant 0 : index
    %c0_6 = arith.constant 0 : index
    %6 = vector.load %arg4[%c0_5, %c0_6] : memref<128x128xbf16, #tpu.memory_space<vmem>>, vector<128x128xbf16>
    %c0_7 = arith.constant 0 : index
    %c0_8 = arith.constant 0 : index
    %7 = vector.load %arg5[%c0_7, %c0_8] : memref<128x128xbf16, #tpu.memory_space<vmem>>, vector<128x128xbf16>
    %cst_9 = arith.constant dense<0.000000e+00> : vector<128x128xf32>
    %8 = tpu.matmul %6, %7, %cst_9 {dimension_numbers = #tpu.dot_dimension_numbers<[1], [0], [0], [1], [0, 0, 1, 1], [], []>} : vector<128x128xbf16>, vector<128x128xbf16>, vector<128x128xf32> -> vector<128x128xf32>
    %c0_10 = arith.constant 0 : index
    %c0_11 = arith.constant 0 : index
    %9 = vector.load %arg6[%c0_10, %c0_11] : memref<1x128xf32, #tpu.memory_space<vmem>>, vector<1x128xf32>
    %10 = vector.broadcast %9 : vector<1x128xf32> to vector<128x128xf32>
    %11 = arith.addf %8, %10 : vector<128x128xf32>
    %12 = arith.addf %5, %11 : vector<128x128xf32>
    %cst_12 = arith.constant 0.000000e+00 : f32
    %13 = vector.broadcast %cst_12 : f32 to vector<128x128xf32>
    %14 = arith.cmpf ogt, %12, %13 : vector<128x128xf32>
    %cst_13 = arith.constant 2.000000e-01 : f32
    %15 = vector.broadcast %cst_13 : f32 to vector<128x128xf32>
    %16 = arith.mulf %15, %12 : vector<128x128xf32>
    %17 = arith.select %14, %12, %16 : vector<128x128xi1>, vector<128x128xf32>
    %c0_14 = arith.constant 0 : index
    %c0_15 = arith.constant 0 : index
    %18 = vector.load %arg7[%c0_14, %c0_15] : memref<128x128xf32, #tpu.memory_space<vmem>>, vector<128x128xf32>
    tpu.vector_store %arg7[%c0_14, %c0_15], %17 {strides = array<i32>} : memref<128x128xf32, #tpu.memory_space<vmem>>, vector<128x128xf32>,
    %c128_i32 = arith.constant 128 : i32
    %19 = arith.muli %arg0, %c128_i32 : i32
    %20 = tpu.iota {dimensions = array<i32: 0>} : vector<128x1xi32>
    %21 = vector.broadcast %19 : i32 to vector<128x1xi32>
    %22 = arith.addi %21, %20 : vector<128x1xi32>
    %c512_i32 = arith.constant 512 : i32
    %23 = vector.broadcast %c512_i32 : i32 to vector<128x1xi32>
    %24 = arith.cmpi slt, %22, %23 : vector<128x1xi32>
    %cst_16 = arith.constant 0.000000e+00 : f32
    %25 = vector.shape_cast %24 : vector<128x1xi1> to vector<128x1xi1>
    %26 = vector.broadcast %25 : vector<128x1xi1> to vector<128x128xi1>
    %27 = vector.broadcast %cst_16 : f32 to vector<128x128xf32>
    %28 = arith.select %26, %17, %27 : vector<128x128xi1>, vector<128x128xf32>
    %cst_17 = arith.constant dense<0.000000e+00> : vector<128xf32>
    %29 = vector.multi_reduction <add>, %28, %cst_17 [0] : vector<128x128xf32> to vector<128xf32>
    %30 = vector.shape_cast %29 : vector<128xf32> to vector<1x128xf32>
    %31 = arith.mulf %28, %28 : vector<128x128xf32>
    %cst_18 = arith.constant dense<0.000000e+00> : vector<128xf32>
    %32 = vector.multi_reduction <add>, %31, %cst_18 [0] : vector<128x128xf32> to vector<128xf32>
    %33 = vector.shape_cast %32 : vector<128xf32> to vector<1x128xf32>
    %34 = vector.shape_cast %30 : vector<1x128xf32> to vector<1x1x128xf32>
    %c0_19 = arith.constant 0 : index
    %c0_20 = arith.constant 0 : index
    %c0_21 = arith.constant 0 : index
    %35 = vector.load %arg8[%c0_19, %c0_20, %c0_21] : memref<1x1x128xf32, #tpu.memory_space<vmem>>, vector<1x1x128xf32>
    tpu.vector_store %arg8[%c0_19, %c0_20, %c0_21], %34 {strides = array<i32>} : memref<1x1x128xf32, #tpu.memory_space<vmem>>, vector<1x1x128xf32>,
    %36 = vector.shape_cast %33 : vector<1x128xf32> to vector<1x1x128xf32>
    %c0_22 = arith.constant 0 : index
    %c0_23 = arith.constant 0 : index
    %c0_24 = arith.constant 0 : index
    %37 = vector.load %arg9[%c0_22, %c0_23, %c0_24] : memref<1x1x128xf32, #tpu.memory_space<vmem>>, vector<1x1x128xf32>
    tpu.vector_store %arg9[%c0_22, %c0_23, %c0_24], %36 {strides = array<i32>} : memref<1x1x128xf32, #tpu.memory_space<vmem>>, vector<1x1x128xf32>,
    return
  }
  func.func @transform_0(%arg0: i32) -> (i32, i32) {
    %c0_i32 = arith.constant 0 : i32
    %c0_i32_0 = arith.constant 0 : i32
    return %arg0, %c0_i32 : i32, i32
  }
  func.func @transform_1(%arg0: i32) -> (i32, i32) {
    %c0_i32 = arith.constant 0 : i32
    %c0_i32_0 = arith.constant 0 : i32
    %c0_i32_1 = arith.constant 0 : i32
    return %c0_i32, %c0_i32_0 : i32, i32
  }
  func.func @transform_2(%arg0: i32) -> (i32, i32) {
    %c0_i32 = arith.constant 0 : i32
    %c0_i32_0 = arith.constant 0 : i32
    %c0_i32_1 = arith.constant 0 : i32
    return %c0_i32, %c0_i32_0 : i32, i32
  }
  func.func @transform_3(%arg0: i32) -> (i32, i32) {
    %c0_i32 = arith.constant 0 : i32
    %c0_i32_0 = arith.constant 0 : i32
    return %arg0, %c0_i32 : i32, i32
  }
  func.func @transform_4(%arg0: i32) -> (i32, i32) {
    %c0_i32 = arith.constant 0 : i32
    %c0_i32_0 = arith.constant 0 : i32
    %c0_i32_1 = arith.constant 0 : i32
    return %c0_i32, %c0_i32_0 : i32, i32
  }
  func.func @transform_5(%arg0: i32) -> (i32, i32) {
    %c0_i32 = arith.constant 0 : i32
    %c0_i32_0 = arith.constant 0 : i32
    %c0_i32_1 = arith.constant 0 : i32
    return %c0_i32, %c0_i32_0 : i32, i32
  }
  func.func @transform_6(%arg0: i32) -> (i32, i32) {
    %c0_i32 = arith.constant 0 : i32
    %c0_i32_0 = arith.constant 0 : i32
    return %arg0, %c0_i32 : i32, i32
  }
  func.func @transform_7(%arg0: i32) -> (i32, i32, i32) {
    %c0_i32 = arith.constant 0 : i32
    %c0_i32_0 = arith.constant 0 : i32
    %c0_i32_1 = arith.constant 0 : i32
    return %arg0, %c0_i32, %c0_i32_0 : i32, i32, i32
  }
  func.func @transform_8(%arg0: i32) -> (i32, i32, i32) {
    %c0_i32 = arith.constant 0 : i32
    %c0_i32_0 = arith.constant 0 : i32
    %c0_i32_1 = arith.constant 0 : i32
    return %arg0, %c0_i32, %c0_i32_0 : i32, i32, i32
  }
}

module attributes {stable_mosaic.version = 11 : i64} {
  func.func @_bn_affine_kernel(%arg0: i32, %arg1: memref<128x128xf32, #tpu.memory_space<vmem>>, %arg2: memref<1x128xf32, #tpu.memory_space<vmem>>, %arg3: memref<1x128xf32, #tpu.memory_space<vmem>>, %arg4: memref<128x128xf32, #tpu.memory_space<vmem>>) attributes {dimension_semantics = [#tpu.dimension_semantics<parallel>], iteration_bounds = array<i64: 4>, scalar_prefetch = 0 : i64, scratch_operands = 0 : i64, tpu.core_type = #tpu.core_type<tc>, window_params = [{transform_indices = @transform_0, window_bounds = array<i64: 128, 128>}, {pipeline_mode = #tpu.pipeline_mode<synchronous>, transform_indices = @transform_1, window_bounds = array<i64: 1, 128>}, {pipeline_mode = #tpu.pipeline_mode<synchronous>, transform_indices = @transform_2, window_bounds = array<i64: 1, 128>}, {transform_indices = @transform_3, window_bounds = array<i64: 128, 128>}]} {
    %c0 = arith.constant 0 : index
    %c0_0 = arith.constant 0 : index
    %0 = vector.load %arg1[%c0, %c0_0] : memref<128x128xf32, #tpu.memory_space<vmem>>, vector<128x128xf32>
    %c0_1 = arith.constant 0 : index
    %c0_2 = arith.constant 0 : index
    %1 = vector.load %arg2[%c0_1, %c0_2] : memref<1x128xf32, #tpu.memory_space<vmem>>, vector<1x128xf32>
    %2 = vector.broadcast %1 : vector<1x128xf32> to vector<128x128xf32>
    %3 = arith.mulf %0, %2 : vector<128x128xf32>
    %c0_3 = arith.constant 0 : index
    %c0_4 = arith.constant 0 : index
    %4 = vector.load %arg3[%c0_3, %c0_4] : memref<1x128xf32, #tpu.memory_space<vmem>>, vector<1x128xf32>
    %5 = vector.broadcast %4 : vector<1x128xf32> to vector<128x128xf32>
    %6 = arith.addf %3, %5 : vector<128x128xf32>
    %c0_5 = arith.constant 0 : index
    %c0_6 = arith.constant 0 : index
    %7 = vector.load %arg4[%c0_5, %c0_6] : memref<128x128xf32, #tpu.memory_space<vmem>>, vector<128x128xf32>
    tpu.vector_store %arg4[%c0_5, %c0_6], %6 {strides = array<i32>} : memref<128x128xf32, #tpu.memory_space<vmem>>, vector<128x128xf32>,
    return
  }
  func.func @transform_0(%arg0: i32) -> (i32, i32) {
    %c0_i32 = arith.constant 0 : i32
    %c0_i32_0 = arith.constant 0 : i32
    return %arg0, %c0_i32 : i32, i32
  }
  func.func @transform_1(%arg0: i32) -> (i32, i32) {
    %c0_i32 = arith.constant 0 : i32
    %c0_i32_0 = arith.constant 0 : i32
    %c0_i32_1 = arith.constant 0 : i32
    return %c0_i32, %c0_i32_0 : i32, i32
  }
  func.func @transform_2(%arg0: i32) -> (i32, i32) {
    %c0_i32 = arith.constant 0 : i32
    %c0_i32_0 = arith.constant 0 : i32
    %c0_i32_1 = arith.constant 0 : i32
    return %c0_i32, %c0_i32_0 : i32, i32
  }
  func.func @transform_3(%arg0: i32) -> (i32, i32) {
    %c0_i32 = arith.constant 0 : i32
    %c0_i32_0 = arith.constant 0 : i32
    return %arg0, %c0_i32 : i32, i32
  }
}

</mosaic_0001>

<llo_original>
// kernel: residual_block_forward.5
$region0: #{residual_block_forward.5}
  #allocation0 [shape = 'u32[]', space=smem, size = 0x4, offset = 0x4, fixed_abs, tag = 'smem constant byte address 0x4 - core index']
  #allocation1 [shape = 'u32[144,128]{1,0:T(1,128)}', space=vmem, size = 0x12000, scoped, tag = 'internal scratch']
  %s0 = inlined_call_operand.vmem [shape: f32[512,128], index: 0, kind: input, shape index: {}]
  %s1 = inlined_call_operand.vmem [shape: f32[1,128], index: 1, kind: input, shape index: {}]
  %s2 = inlined_call_operand.vmem [shape: f32[1,128], index: 2, kind: input, shape index: {}]
  %s3 = inlined_call_operand.vmem [shape: bf16[512,128], index: 3, kind: output, shape index: {}]
  %s4 = sld [smem:[#allocation0]]
  $region45: #{residual_block_forward.5} parent=0
    _
  %s6 = ssub.s32 1, %s4
  %s7 = scalar_select 0, %s6, %s4
  loop: start=0, step=1, limit=6
  $region2: #{residual_block_forward.5} parent=0 // loop_pre_header
    _
  $region3: #{residual_block_forward.5} parent=0 // loop_header
    %s9 = sphi 0, %s13
    %p10 = scmp.ge.s32.totalorder %s9, 6
    %s19 = sphi 0, %s21
    %s22 = sphi 0, %s19
    %s23 = sphi 0, %s22
    %s39 = sphi 0, %s23
    %s43 = sphi 0, %s43
    %s45 = sphi 0, %s43
    %s46 = sphi 0, %s45
    %s60 = sphi 0, %s46
    %s64 = sphi 0, %s64
    %s66 = sphi 0, %s64
    %s67 = sphi 0, %s66
    %s81 = sphi 0, %s67
    %s87 = sphi 0, %s89
    %s90 = sphi 0, %s87
    %s91 = sphi 0, %s90
    %s107 = sphi 0, %s91
  $region4: #{residual_block_forward.5} parent=0 // loop_header_branch
    %12 = sbr.rel (%p10) target = $region8
  $region5: #{residual_block_forward.5} parent=0 // loop_body
    %s14 = ssub.s32 %s9, 1
    %s15 = ssub.s32 %s9, 2
    %s16 = sadd.s32 %s9, 1
    %s17 = ssub.s32 %s9, %s16
    %p18 = scmp.eq.s32.totalorder %s17, 0
    %s20 = sadd.s32 %s19, 1
    %s21 = scalar_select %p18, %s19, %s20
    %p24 = pneg %p18
    %p25 = scmp.eq.s32.totalorder %s9, 3
    %p26 = por %p24, %p25
    %p27 = scmp.ne.s32.totalorder %s19, %s22
    %p28 = scmp.eq.s32.totalorder %s9, 0
    %p29 = por %p27, %p28
    %p30 = scmp.ne.s32.totalorder %s19, %s22
    %p31 = scmp.eq.s32.totalorder %s14, 3
    %p32 = por %p30, %p31
    %p33 = scmp.ne.s32.totalorder %s22, %s23
    %p34 = scmp.eq.s32.totalorder %s14, 0
    %p35 = por %p33, %p34
    %p36 = scmp.ne.s32.totalorder %s22, %s23
    %p37 = scmp.eq.s32.totalorder %s15, 3
    %p38 = por %p36, %p37
    %p40 = scmp.ne.s32.totalorder %s23, %s39
    %p41 = scmp.eq.s32.totalorder %s15, 0
    %p42 = por %p40, %p41
    %s44 = sadd.s32 %s43, 1
    %p47 = scmp.eq.s32.totalorder %s9, 3
    %p48 = scmp.ne.s32.totalorder %s43, %s45
    %p49 = scmp.eq.s32.totalorder %s9, 0
    %p50 = por %p48, %p49
    %p51 = scmp.ne.s32.totalorder %s43, %s45
    %p52 = scmp.eq.s32.totalorder %s14, 3
    %p53 = por %p51, %p52
    %p54 = scmp.ne.s32.totalorder %s45, %s46
    %p55 = scmp.eq.s32.totalorder %s14, 0
    %p56 = por %p54, %p55
    %p57 = scmp.ne.s32.totalorder %s45, %s46
    %p58 = scmp.eq.s32.totalorder %s15, 3
    %p59 = por %p57, %p58
    %p61 = scmp.ne.s32.totalorder %s46, %s60
    %p62 = scmp.eq.s32.totalorder %s15, 0
    %p63 = por %p61, %p62
    %s65 = sadd.s32 %s64, 1
    %p68 = scmp.eq.s32.totalorder %s9, 3
    %p69 = scmp.ne.s32.totalorder %s64, %s66
    %p70 = scmp.eq.s32.totalorder %s9, 0
    %p71 = por %p69, %p70
    %p72 = scmp.ne.s32.totalorder %s64, %s66
    %p73 = scmp.eq.s32.totalorder %s14, 3
    %p74 = por %p72, %p73
    %p75 = scmp.ne.s32.totalorder %s66, %s67
    %p76 = scmp.eq.s32.totalorder %s14, 0
    %p77 = por %p75, %p76
    %p78 = scmp.ne.s32.totalorder %s66, %s67
    %p79 = scmp.eq.s32.totalorder %s15, 3
    %p80 = por %p78, %p79
    %p82 = scmp.ne.s32.totalorder %s67, %s81
    %p83 = scmp.eq.s32.totalorder %s15, 0
    %p84 = por %p82, %p83
    %s85 = ssub.s32 %s9, %s16
    %p86 = scmp.eq.s32.totalorder %s85, 0
    %s88 = sadd.s32 %s87, 1
    %s89 = scalar_select %p86, %s87, %s88
    %p92 = pneg %p86
    %p93 = scmp.eq.s32.totalorder %s9, 3
    %p94 = por %p92, %p93
    %p95 = scmp.ne.s32.totalorder %s87, %s90
    %p96 = scmp.eq.s32.totalorder %s9, 0
    %p97 = por %p95, %p96
    %p98 = scmp.ne.s32.totalorder %s87, %s90
    %p99 = scmp.eq.s32.totalorder %s14, 3
    %p100 = por %p98, %p99
    %p101 = scmp.ne.s32.totalorder %s90, %s91
    %p102 = scmp.eq.s32.totalorder %s14, 0
    %p103 = por %p101, %p102
    %p104 = scmp.ne.s32.totalorder %s90, %s91
    %p105 = scmp.eq.s32.totalorder %s15, 3
    %p106 = por %p104, %p105
    %p108 = scmp.ne.s32.totalorder %s91, %s107
    %p109 = scmp.eq.s32.totalorder %s15, 0
    %p110 = por %p108, %p109
    %p111 = scmp.le.s32.totalorder 1, %s9
    %p112 = scmp.lt.s32.totalorder %s9, 5
    %p113 = pnand %p111, %p112
    %p114 = pneg %p113
    // Predicated region
    $region9: #{residual_block_forward.5} parent=5 // pred_check
      _
    $region10: #{residual_block_forward.5} parent=5 // pred_check_branch
      %116 = sbr.rel (%p113) target = $region12
    $region11: #{residual_block_forward.5} parent=5 // pred_region
      %s117 = ssub.s32 %s9, 1
      // Predicated region
      $region13: #{residual_block_forward.5} parent=11 // pred_check
        %p118 = pneg %p56
      $region14: #{residual_block_forward.5} parent=11 // pred_check_branch
        %120 = sbr.rel (%p118) target = $region16
      $region15: #{residual_block_forward.5} parent=11 // pred_region
        _
      $region16: #{residual_block_forward.5} parent=11 // pred_fallthru
        _
      // Predicated region
      $region17: #{residual_block_forward.5} parent=11 // pred_check
        %p121 = pneg %p77
      $region18: #{residual_block_forward.5} parent=11 // pred_check_branch
        %123 = sbr.rel (%p121) target = $region20
      $region19: #{residual_block_forward.5} parent=11 // pred_region
        _
      $region20: #{residual_block_forward.5} parent=11 // pred_fallthru
        _
    $region12: #{residual_block_forward.5} parent=5 // pred_fallthru
      _
    %p124 = scmp.lt.s32.totalorder %s9, 4
    // Predicated region
    $region21: #{residual_block_forward.5} parent=5 // pred_check
      %p125 = pneg %p124
    $region22: #{residual_block_forward.5} parent=5 // pred_check_branch
      %127 = sbr.rel (%p125) target = $region24
    $region23: #{residual_block_forward.5} parent=5 // pred_region
      // Predicated region
      $region25: #{residual_block_forward.5} parent=23 // pred_check
        %p128 = pneg %p29
      $region26: #{residual_block_forward.5} parent=23 // pred_check_branch
        %130 = sbr.rel (%p128) target = $region28
      $region27: #{residual_block_forward.5} parent=23 // pred_region
        %s131 = smul.u32 16, %s9
        %p132 = scmp.lt.s32.totalorder %s131, 63
        %s133 = scalar_select %p132, %s131, 63
        %s134 = smul.addr %s133, 8
        %s135 = scalar_lea.vmem %s0, %s134
        %s136 = smul.u32 16, %s9
      $region28: #{residual_block_forward.5} parent=23 // pred_fallthru
        _
    $region24: #{residual_block_forward.5} parent=5 // pred_fallthru
      _
    %p137 = scmp.le.s32.totalorder 1, %s9
    %p138 = scmp.lt.s32.totalorder %s9, 5
    %p139 = pnand %p137, %p138
    %p140 = pneg %p139
    // Predicated region
    $region29: #{residual_block_forward.5} parent=5 // pred_check
      _
    $region30: #{residual_block_forward.5} parent=5 // pred_check_branch
      %142 = sbr.rel (%p139) target = $region32
    $region31: #{residual_block_forward.5} parent=5 // pred_region
      %s143 = ssub.s32 %s9, 1
      %s144 = smul.u32 16, %s14
      %p145 = scmp.lt.s32.totalorder %s144, 63
      %s146 = scalar_select %p145, %s144, 63
      %s147 = smul.addr %s146, 8
      %s148 = scalar_lea.vmem %s0, %s147
      %p149 = pneg %p35
      %p150 = pneg %p32
      %p151 = pneg %p56
      %p152 = pneg %p53
      %p153 = pneg %p77
      %p154 = pneg %p74
      %p155 = pneg %p103
      %p156 = pneg %p100
      %s157 = smul.u32 16, %s14
      %p158 = scmp.lt.s32.totalorder %s157, 63
      %s159 = scalar_select %p158, %s157, 63
      %s160 = smul.addr %s159, 4
      %s161 = scalar_lea.vmem %s3, %s160
      %s162 = smul.u32 16, %s14
      %p163 = scmp.lt.s32.totalorder %s162, 63
      %s164 = scalar_select %p163, %s162, 63
      %s165 = smul.addr %s164, 8
      %s166 = scalar_lea.vmem %s0, %s165
      %s167 = smul.u32 16, %s14
      %s168 = smul.u32 16, %s14
      %p169 = scmp.lt.s32.totalorder %s168, 63
      %s170 = scalar_select %p169, %s168, 63
      %s171 = smul.addr %s170, 4
      %s172 = scalar_lea.vmem %s3, %s171
      %s173 = smul.u32 16, %s14
      %v174 = vld [vmem:[%s166] sm:$0xff]
      %v175 = vld [vmem:[%s166 + $0x8] sm:$0xff]
      %v176 = vld [vmem:[%s166 + $0x10] sm:$0xff]
      %v177 = vld [vmem:[%s166 + $0x18] sm:$0xff]
      %v178 = vld [vmem:[%s166 + $0x20] sm:$0xff]
      %v179 = vld [vmem:[%s166 + $0x28] sm:$0xff]
      %v180 = vld [vmem:[%s166 + $0x30] sm:$0xff]
      %v181 = vld [vmem:[%s166 + $0x38] sm:$0xff]
      %v182 = vld [vmem:[%s166 + $0x40] sm:$0xff]
      %v183 = vld [vmem:[%s166 + $0x48] sm:$0xff]
      %v184 = vld [vmem:[%s166 + $0x50] sm:$0xff]
      %v185 = vld [vmem:[%s166 + $0x58] sm:$0xff]
      %v186 = vld [vmem:[%s166 + $0x60] sm:$0xff]
      %v187 = vld [vmem:[%s166 + $0x68] sm:$0xff]
      %v188 = vld [vmem:[%s166 + $0x70] sm:$0xff]
      %v189 = vld [vmem:[%s166 + $0x78] sm:$0xff]
      %v190 = vld [vmem:[%s1] sm:$0x1]
      %v192 = vlaneseq
      %v193 = vshrl.u32 %v192, 7
      %v194 = vsub.s32 0, %v193
      %v195 = vrot.slane %v190, %v194
      %v197 = vmul.f32 %v174, %v195
      %v198 = vmul.f32 %v175, %v195
      %v199 = vmul.f32 %v176, %v195
      %v200 = vmul.f32 %v177, %v195
      %v201 = vmul.f32 %v178, %v195
      %v202 = vmul.f32 %v179, %v195
      %v203 = vmul.f32 %v180, %v195
      %v204 = vmul.f32 %v181, %v195
      %v205 = vmul.f32 %v182, %v195
      %v206 = vmul.f32 %v183, %v195
      %v207 = vmul.f32 %v184, %v195
      %v208 = vmul.f32 %v185, %v195
      %v209 = vmul.f32 %v186, %v195
      %v210 = vmul.f32 %v187, %v195
      %v211 = vmul.f32 %v188, %v195
      %v212 = vmul.f32 %v189, %v195
      %v213 = vld [vmem:[%s2] sm:$0x1]
      %v215 = vlaneseq
      %v216 = vshrl.u32 %v215, 7
      %v217 = vsub.s32 0, %v216
      %v218 = vrot.slane %v213, %v217
      %v220 = vadd.f32 %v197, %v218
      %v221 = vadd.f32 %v198, %v218
      %v222 = vadd.f32 %v199, %v218
      %v223 = vadd.f32 %v200, %v218
      %v224 = vadd.f32 %v201, %v218
      %v225 = vadd.f32 %v202, %v218
      %v226 = vadd.f32 %v203, %v218
      %v227 = vadd.f32 %v204, %v218
      %v228 = vadd.f32 %v205, %v218
      %v229 = vadd.f32 %v206, %v218
      %v230 = vadd.f32 %v207, %v218
      %v231 = vadd.f32 %v208, %v218
      %v232 = vadd.f32 %v209, %v218
      %v233 = vadd.f32 %v210, %v218
      %v234 = vadd.f32 %v211, %v218
      %v235 = vadd.f32 %v212, %v218
      %v236 = vpack.c.bf16 %v221, %v220
      %v237 = vpack.c.bf16 %v223, %v222
      %v238 = vpack.c.bf16 %v225, %v224
      %v239 = vpack.c.bf16 %v227, %v226
      %v240 = vpack.c.bf16 %v229, %v228
      %v241 = vpack.c.bf16 %v231, %v230
      %v242 = vpack.c.bf16 %v233, %v232
      %v243 = vpack.c.bf16 %v235, %v234
      %v252 = vunpack.c.l.b16 %v236
      %v253 = vunpack.c.h.b16 %v236
      %v254 = vunpack.c.l.b16 %v237
      %v255 = vunpack.c.h.b16 %v237
      %v256 = vunpack.c.l.b16 %v238
      %v257 = vunpack.c.h.b16 %v238
      %v258 = vunpack.c.l.b16 %v239
      %v259 = vunpack.c.h.b16 %v239
      %v260 = vunpack.c.l.b16 %v240
      %v261 = vunpack.c.h.b16 %v240
      %v262 = vunpack.c.l.b16 %v241
      %v263 = vunpack.c.h.b16 %v241
      %v264 = vunpack.c.l.b16 %v242
      %v265 = vunpack.c.h.b16 %v242
      %v266 = vunpack.c.l.b16 %v243
      %v267 = vunpack.c.h.b16 %v243
      %v268 = vpack.c.b16 %v252, %v252
      %v269 = vpack.c.b16 %v253, %v253
      %v270 = vpack.c.b16 %v254, %v254
      %v271 = vpack.c.b16 %v255, %v255
      %v272 = vpack.c.b16 %v256, %v256
      %v273 = vpack.c.b16 %v257, %v257
      %v274 = vpack.c.b16 %v258, %v258
      %v275 = vpack.c.b16 %v259, %v259
      %v276 = vpack.c.b16 %v260, %v260
      %v277 = vpack.c.b16 %v261, %v261
      %v278 = vpack.c.b16 %v262, %v262
      %v279 = vpack.c.b16 %v263, %v263
      %v280 = vpack.c.b16 %v264, %v264
      %v281 = vpack.c.b16 %v265, %v265
      %v282 = vpack.c.b16 %v266, %v266
      %v283 = vpack.c.b16 %v267, %v267
      %300 = vst [vmem:[%s172] sm:$0xf] %v268
      %301 = vst [vmem:[%s172 + $0x4] sm:$0xf] %v269
      %302 = vst [vmem:[%s172 + $0x8] sm:$0xf] %v270
      %303 = vst [vmem:[%s172 + $0xc] sm:$0xf] %v271
      %304 = vst [vmem:[%s172 + $0x10] sm:$0xf] %v272
      %305 = vst [vmem:[%s172 + $0x14] sm:$0xf] %v273
      %306 = vst [vmem:[%s172 + $0x18] sm:$0xf] %v274
      %307 = vst [vmem:[%s172 + $0x1c] sm:$0xf] %v275
      %308 = vst [vmem:[%s172 + $0x20] sm:$0xf] %v276
      %309 = vst [vmem:[%s172 + $0x24] sm:$0xf] %v277
      %310 = vst [vmem:[%s172 + $0x28] sm:$0xf] %v278
      %311 = vst [vmem:[%s172 + $0x2c] sm:$0xf] %v279
      %312 = vst [vmem:[%s172 + $0x30] sm:$0xf] %v280
      %313 = vst [vmem:[%s172 + $0x34] sm:$0xf] %v281
      %314 = vst [vmem:[%s172 + $0x38] sm:$0xf] %v282
      %315 = vst [vmem:[%s172 + $0x3c] sm:$0xf] %v283
      %s316 = smul.u32 16, %s14
      %p317 = scmp.lt.s32.totalorder %s316, 63
      %s318 = scalar_select %p317, %s316, 63
      %s319 = smul.addr %s318, 4
      %s320 = scalar_lea.vmem %s3, %s319
      // Predicated region
      $region33: #{residual_block_forward.5} parent=31 // pred_check
        %p321 = pneg %p100
      $region34: #{residual_block_forward.5} parent=31 // pred_check_branch
        %323 = sbr.rel (%p321) target = $region36
      $region35: #{residual_block_forward.5} parent=31 // pred_region
        %s324 = smul.u32 16, %s14
      $region36: #{residual_block_forward.5} parent=31 // pred_fallthru
        _
    $region32: #{residual_block_forward.5} parent=5 // pred_fallthru
      _
    %p325 = scmp.le.s32.totalorder 2, %s9
    // Predicated region
    $region37: #{residual_block_forward.5} parent=5 // pred_check
      %p326 = pneg %p325
    $region38: #{residual_block_forward.5} parent=5 // pred_check_branch
      %328 = sbr.rel (%p326) target = $region40
    $region39: #{residual_block_forward.5} parent=5 // pred_region
      %s329 = ssub.s32 %s9, 2
      // Predicated region
      $region41: #{residual_block_forward.5} parent=39 // pred_check
        %p330 = pneg %p106
      $region42: #{residual_block_forward.5} parent=39 // pred_check_branch
        %332 = sbr.rel (%p330) target = $region44
      $region43: #{residual_block_forward.5} parent=39 // pred_region
        %s333 = smul.u32 16, %s15
        %p334 = scmp.lt.s32.totalorder %s333, 63
        %s335 = scalar_select %p334, %s333, 63
        %s336 = smul.addr %s335, 4
        %s337 = scalar_lea.vmem %s3, %s336
      $region44: #{residual_block_forward.5} parent=39 // pred_fallthru
        _
    $region40: #{residual_block_forward.5} parent=5 // pred_fallthru
      _
  $region6: #{residual_block_forward.5} parent=0 // loop_footer
    %s13 = sadd.s32 1, %s9
  $region7: #{residual_block_forward.5} parent=0 // loop_footer_branch
    %8 = sbr.rel target = $region3
  $region8: #{residual_block_forward.5} parent=0 // loop_exit
    _

// kernel: residual_block_forward.4
$region0: #{residual_block_forward.4}
  #allocation0 [shape = 'u32[]', space=smem, size = 0x4, offset = 0x4, fixed_abs, tag = 'smem constant byte address 0x4 - core index']
  #allocation1 [shape = 'u32[144,128]{1,0:T(1,128)}', space=vmem, size = 0x12000, scoped, tag = 'internal scratch']
  %s0 = inlined_call_operand.vmem [shape: bf16[512,128], index: 0, kind: input, shape index: {}]
  %s1 = inlined_call_operand.vmem [shape: bf16[128,128], index: 1, kind: input, shape index: {}]
  %s2 = inlined_call_operand.vmem [shape: f32[1,128], index: 2, kind: input, shape index: {}]
  %s3 = inlined_call_operand.vmem [shape: f32[512,128], index: 3, kind: output, shape index: {0}]
  %s4 = inlined_call_operand.vmem [shape: f32[4,1,128], index: 4, kind: output, shape index: {1}]
  %s5 = inlined_call_operand.vmem [shape: f32[4,1,128], index: 5, kind: output, shape index: {2}]
  %6 = xla_tuple %s3, %s4, %s5
  %s7 = sld [smem:[#allocation0]]
  $region61: #{residual_block_forward.4} parent=0
    _
  %s9 = ssub.s32 1, %s7
  %s10 = scalar_select 0, %s9, %s7
  loop: start=0, step=1, limit=6
  $region2: #{residual_block_forward.4} parent=0 // loop_pre_header
    _
  $region3: #{residual_block_forward.4} parent=0 // loop_header
    %s12 = sphi 0, %s16
    %p13 = scmp.ge.s32.totalorder %s12, 6
    %s22 = sphi 0, %s24
    %s25 = sphi 0, %s22
    %s26 = sphi 0, %s25
    %s42 = sphi 0, %s26
    %s46 = sphi 0, %s46
    %s48 = sphi 0, %s46
    %s49 = sphi 0, %s48
    %s63 = sphi 0, %s49
    %s67 = sphi 0, %s67
    %s69 = sphi 0, %s67
    %s70 = sphi 0, %s69
    %s84 = sphi 0, %s70
    %s90 = sphi 0, %s92
    %s93 = sphi 0, %s90
    %s94 = sphi 0, %s93
    %s110 = sphi 0, %s94
    %s116 = sphi 0, %s118
    %s119 = sphi 0, %s116
    %s120 = sphi 0, %s119
    %s136 = sphi 0, %s120
    %s142 = sphi 0, %s144
    %s145 = sphi 0, %s142
    %s146 = sphi 0, %s145
    %s162 = sphi 0, %s146
  $region4: #{residual_block_forward.4} parent=0 // loop_header_branch
    %15 = sbr.rel (%p13) target = $region8
  $region5: #{residual_block_forward.4} parent=0 // loop_body
    %s17 = ssub.s32 %s12, 1
    %s18 = ssub.s32 %s12, 2
    %s19 = sadd.s32 %s12, 1
    %s20 = ssub.s32 %s12, %s19
    %p21 = scmp.eq.s32.totalorder %s20, 0
    %s23 = sadd.s32 %s22, 1
    %s24 = scalar_select %p21, %s22, %s23
    %p27 = pneg %p21
    %p28 = scmp.eq.s32.totalorder %s12, 3
    %p29 = por %p27, %p28
    %p30 = scmp.ne.s32.totalorder %s22, %s25
    %p31 = scmp.eq.s32.totalorder %s12, 0
    %p32 = por %p30, %p31
    %p33 = scmp.ne.s32.totalorder %s22, %s25
    %p34 = scmp.eq.s32.totalorder %s17, 3
    %p35 = por %p33, %p34
    %p36 = scmp.ne.s32.totalorder %s25, %s26
    %p37 = scmp.eq.s32.totalorder %s17, 0
    %p38 = por %p36, %p37
    %p39 = scmp.ne.s32.totalorder %s25, %s26
    %p40 = scmp.eq.s32.totalorder %s18, 3
    %p41 = por %p39, %p40
    %p43 = scmp.ne.s32.totalorder %s26, %s42
    %p44 = scmp.eq.s32.totalorder %s18, 0
    %p45 = por %p43, %p44
    %s47 = sadd.s32 %s46, 1
    %p50 = scmp.eq.s32.totalorder %s12, 3
    %p51 = scmp.ne.s32.totalorder %s46, %s48
    %p52 = scmp.eq.s32.totalorder %s12, 0
    %p53 = por %p51, %p52
    %p54 = scmp.ne.s32.totalorder %s46, %s48
    %p55 = scmp.eq.s32.totalorder %s17, 3
    %p56 = por %p54, %p55
    %p57 = scmp.ne.s32.totalorder %s48, %s49
    %p58 = scmp.eq.s32.totalorder %s17, 0
    %p59 = por %p57, %p58
    %p60 = scmp.ne.s32.totalorder %s48, %s49
    %p61 = scmp.eq.s32.totalorder %s18, 3
    %p62 = por %p60, %p61
    %p64 = scmp.ne.s32.totalorder %s49, %s63
    %p65 = scmp.eq.s32.totalorder %s18, 0
    %p66 = por %p64, %p65
    %s68 = sadd.s32 %s67, 1
    %p71 = scmp.eq.s32.totalorder %s12, 3
    %p72 = scmp.ne.s32.totalorder %s67, %s69
    %p73 = scmp.eq.s32.totalorder %s12, 0
    %p74 = por %p72, %p73
    %p75 = scmp.ne.s32.totalorder %s67, %s69
    %p76 = scmp.eq.s32.totalorder %s17, 3
    %p77 = por %p75, %p76
    %p78 = scmp.ne.s32.totalorder %s69, %s70
    %p79 = scmp.eq.s32.totalorder %s17, 0
    %p80 = por %p78, %p79
    %p81 = scmp.ne.s32.totalorder %s69, %s70
    %p82 = scmp.eq.s32.totalorder %s18, 3
    %p83 = por %p81, %p82
    %p85 = scmp.ne.s32.totalorder %s70, %s84
    %p86 = scmp.eq.s32.totalorder %s18, 0
    %p87 = por %p85, %p86
    %s88 = ssub.s32 %s12, %s19
    %p89 = scmp.eq.s32.totalorder %s88, 0
    %s91 = sadd.s32 %s90, 1
    %s92 = scalar_select %p89, %s90, %s91
    %p95 = pneg %p89
    %p96 = scmp.eq.s32.totalorder %s12, 3
    %p97 = por %p95, %p96
    %p98 = scmp.ne.s32.totalorder %s90, %s93
    %p99 = scmp.eq.s32.totalorder %s12, 0
    %p100 = por %p98, %p99
    %p101 = scmp.ne.s32.totalorder %s90, %s93
    %p102 = scmp.eq.s32.totalorder %s17, 3
    %p103 = por %p101, %p102
    %p104 = scmp.ne.s32.totalorder %s93, %s94
    %p105 = scmp.eq.s32.totalorder %s17, 0
    %p106 = por %p104, %p105
    %p107 = scmp.ne.s32.totalorder %s93, %s94
    %p108 = scmp.eq.s32.totalorder %s18, 3
    %p109 = por %p107, %p108
    %p111 = scmp.ne.s32.totalorder %s94, %s110
    %p112 = scmp.eq.s32.totalorder %s18, 0
    %p113 = por %p111, %p112
    %s114 = ssub.s32 %s12, %s19
    %p115 = scmp.eq.s32.totalorder %s114, 0
    %s117 = sadd.s32 %s116, 1
    %s118 = scalar_select %p115, %s116, %s117
    %p121 = pneg %p115
    %p122 = scmp.eq.s32.totalorder %s12, 3
    %p123 = por %p121, %p122
    %p124 = scmp.ne.s32.totalorder %s116, %s119
    %p125 = scmp.eq.s32.totalorder %s12, 0
    %p126 = por %p124, %p125
    %p127 = scmp.ne.s32.totalorder %s116, %s119
    %p128 = scmp.eq.s32.totalorder %s17, 3
    %p129 = por %p127, %p128
    %p130 = scmp.ne.s32.totalorder %s119, %s120
    %p131 = scmp.eq.s32.totalorder %s17, 0
    %p132 = por %p130, %p131
    %p133 = scmp.ne.s32.totalorder %s119, %s120
    %p134 = scmp.eq.s32.totalorder %s18, 3
    %p135 = por %p133, %p134
    %p137 = scmp.ne.s32.totalorder %s120, %s136
    %p138 = scmp.eq.s32.totalorder %s18, 0
    %p139 = por %p137, %p138
    %s140 = ssub.s32 %s12, %s19
    %p141 = scmp.eq.s32.totalorder %s140, 0
    %s143 = sadd.s32 %s142, 1
    %s144 = scalar_select %p141, %s142, %s143
    %p147 = pneg %p141
    %p148 = scmp.eq.s32.totalorder %s12, 3
    %p149 = por %p147, %p148
    %p150 = scmp.ne.s32.totalorder %s142, %s145
    %p151 = scmp.eq.s32.totalorder %s12, 0
    %p152 = por %p150, %p151
    %p153 = scmp.ne.s32.totalorder %s142, %s145
    %p154 = scmp.eq.s32.totalorder %s17, 3
    %p155 = por %p153, %p154
    %p156 = scmp.ne.s32.totalorder %s145, %s146
    %p157 = scmp.eq.s32.totalorder %s17, 0
    %p158 = por %p156, %p157
    %p159 = scmp.ne.s32.totalorder %s145, %s146
    %p160 = scmp.eq.s32.totalorder %s18, 3
    %p161 = por %p159, %p160
    %p163 = scmp.ne.s32.totalorder %s146, %s162
    %p164 = scmp.eq.s32.totalorder %s18, 0
    %p165 = por %p163, %p164
    %p166 = scmp.le.s32.totalorder 1, %s12
    %p167 = scmp.lt.s32.totalorder %s12, 5
    %p168 = pnand %p166, %p167
    %p169 = pneg %p168
    // Predicated region
    $region9: #{residual_block_forward.4} parent=5 // pred_check
      _
    $region10: #{residual_block_forward.4} parent=5 // pred_check_branch
      %171 = sbr.rel (%p168) target = $region12
    $region11: #{residual_block_forward.4} parent=5 // pred_region
      %s172 = ssub.s32 %s12, 1
      // Predicated region
      $region13: #{residual_block_forward.4} parent=11 // pred_check
        %p173 = pneg %p59
      $region14: #{residual_block_forward.4} parent=11 // pred_check_branch
        %175 = sbr.rel (%p173) target = $region16
      $region15: #{residual_block_forward.4} parent=11 // pred_region
        _
      $region16: #{residual_block_forward.4} parent=11 // pred_fallthru
        _
      // Predicated region
      $region17: #{residual_block_forward.4} parent=11 // pred_check
        %p176 = pneg %p80
      $region18: #{residual_block_forward.4} parent=11 // pred_check_branch
        %178 = sbr.rel (%p176) target = $region20
      $region19: #{residual_block_forward.4} parent=11 // pred_region
        _
      $region20: #{residual_block_forward.4} parent=11 // pred_fallthru
        _
    $region12: #{residual_block_forward.4} parent=5 // pred_fallthru
      _
    %p179 = scmp.lt.s32.totalorder %s12, 4
    // Predicated region
    $region21: #{residual_block_forward.4} parent=5 // pred_check
      %p180 = pneg %p179
    $region22: #{residual_block_forward.4} parent=5 // pred_check_branch
      %182 = sbr.rel (%p180) target = $region24
    $region23: #{residual_block_forward.4} parent=5 // pred_region
      // Predicated region
      $region25: #{residual_block_forward.4} parent=23 // pred_check
        %p183 = pneg %p32
      $region26: #{residual_block_forward.4} parent=23 // pred_check_branch
        %185 = sbr.rel (%p183) target = $region28
      $region27: #{residual_block_forward.4} parent=23 // pred_region
        %s186 = smul.u32 16, %s12
        %p187 = scmp.lt.s32.totalorder %s186, 63
        %s188 = scalar_select %p187, %s186, 63
        %s189 = smul.addr %s188, 4
        %s190 = scalar_lea.vmem %s0, %s189
        %s191 = smul.u32 16, %s12
      $region28: #{residual_block_forward.4} parent=23 // pred_fallthru
        _
    $region24: #{residual_block_forward.4} parent=5 // pred_fallthru
      _
    %p192 = scmp.le.s32.totalorder 1, %s12
    %p193 = scmp.lt.s32.totalorder %s12, 5
    %p194 = pnand %p192, %p193
    %p195 = pneg %p194
    // Predicated region
    $region29: #{residual_block_forward.4} parent=5 // pred_check
      _
    $region30: #{residual_block_forward.4} parent=5 // pred_check_branch
      %197 = sbr.rel (%p194) target = $region32
    $region31: #{residual_block_forward.4} parent=5 // pred_region
      %s198 = ssub.s32 %s12, 1
      %s199 = smul.u32 16, %s17
      %p200 = scmp.lt.s32.totalorder %s199, 63
      %s201 = scalar_select %p200, %s199, 63
      %s202 = smul.addr %s201, 4
      %s203 = scalar_lea.vmem %s0, %s202
      %p204 = pneg %p38
      %p205 = pneg %p35
      %p206 = pneg %p59
      %p207 = pneg %p56
      %p208 = pneg %p80
      %p209 = pneg %p77
      %p210 = pneg %p106
      %p211 = pneg %p103
      %s212 = smul.u32 16, %s17
      %p213 = scmp.lt.s32.totalorder %s212, 63
      %s214 = scalar_select %p213, %s212, 63
      %s215 = smul.addr %s214, 8
      %s216 = scalar_lea.vmem %s3, %s215
      %p217 = pneg %p132
      %p218 = pneg %p129
      %p219 = scmp.lt.s32.totalorder %s17, 3
      %s220 = scalar_select %p219, %s17, 3
      %s221 = scalar_lea.vmem %s4, %s220
      %p222 = pneg %p158
      %p223 = pneg %p155
      %p224 = scmp.lt.s32.totalorder %s17, 3
      %s225 = scalar_select %p224, %s17, 3
      %s226 = scalar_lea.vmem %s5, %s225
      %s227 = smul.u32 16, %s17
      %p228 = scmp.lt.s32.totalorder %s227, 63
      %s229 = scalar_select %p228, %s227, 63
      %s230 = smul.addr %s229, 4
      %s231 = scalar_lea.vmem %s0, %s230
      %s232 = smul.u32 16, %s17
      %s233 = smul.u32 16, %s17
      %p234 = scmp.lt.s32.totalorder %s233, 63
      %s235 = scalar_select %p234, %s233, 63
      %s236 = smul.addr %s235, 8
      %s237 = scalar_lea.vmem %s3, %s236
      %s238 = smul.u32 16, %s17
      %p239 = scmp.lt.s32.totalorder %s17, 3
      %s240 = scalar_select %p239, %s17, 3
      %s241 = scalar_lea.vmem %s4, %s240
      %p242 = scmp.lt.s32.totalorder %s17, 3
      %s243 = scalar_select %p242, %s17, 3
      %s244 = scalar_lea.vmem %s5, %s243
      %v246 = vld [vmem:[%s231] sm:$0xf]
      %v247 = vld [vmem:[%s231 + $0x4] sm:$0xf]
      %v248 = vld [vmem:[%s231 + $0x8] sm:$0xf]
      %v249 = vld [vmem:[%s231 + $0xc] sm:$0xf]
      %v250 = vld [vmem:[%s231 + $0x10] sm:$0xf]
      %v251 = vld [vmem:[%s231 + $0x14] sm:$0xf]
      %v252 = vld [vmem:[%s231 + $0x18] sm:$0xf]
      %v253 = vld [vmem:[%s231 + $0x1c] sm:$0xf]
      %v254 = vld [vmem:[%s231 + $0x20] sm:$0xf]
      %v255 = vld [vmem:[%s231 + $0x24] sm:$0xf]
      %v256 = vld [vmem:[%s231 + $0x28] sm:$0xf]
      %v257 = vld [vmem:[%s231 + $0x2c] sm:$0xf]
      %v258 = vld [vmem:[%s231 + $0x30] sm:$0xf]
      %v259 = vld [vmem:[%s231 + $0x34] sm:$0xf]
      %v260 = vld [vmem:[%s231 + $0x38] sm:$0xf]
      %v261 = vld [vmem:[%s231 + $0x3c] sm:$0xf]
      %v262 = vld [vmem:[%s1] sm:$0xf]
      %v263 = vld [vmem:[%s1 + $0x4] sm:$0xf]
      %v264 = vld [vmem:[%s1 + $0x8] sm:$0xf]
      %v265 = vld [vmem:[%s1 + $0xc] sm:$0xf]
      %v266 = vld [vmem:[%s1 + $0x10] sm:$0xf]
      %v267 = vld [vmem:[%s1 + $0x14] sm:$0xf]
      %v268 = vld [vmem:[%s1 + $0x18] sm:$0xf]
      %v269 = vld [vmem:[%s1 + $0x1c] sm:$0xf]
      %v270 = vld [vmem:[%s1 + $0x20] sm:$0xf]
      %v271 = vld [vmem:[%s1 + $0x24] sm:$0xf]
      %v272 = vld [vmem:[%s1 + $0x28] sm:$0xf]
      %v273 = vld [vmem:[%s1 + $0x2c] sm:$0xf]
      %v274 = vld [vmem:[%s1 + $0x30] sm:$0xf]
      %v275 = vld [vmem:[%s1 + $0x34] sm:$0xf]
      %v276 = vld [vmem:[%s1 + $0x38] sm:$0xf]
      %v277 = vld [vmem:[%s1 + $0x3c] sm:$0xf]
      %v278 = vld [vmem:[%s2] sm:$0x1]
      %v280 = vlaneseq
      %v281 = vshrl.u32 %v280, 7
      %v282 = vsub.s32 0, %v281
      %v283 = vrot.slane %v278, %v282
      %v301 = vunpack.c.l.b16 %v246
      %v302 = vunpack.c.l.b16 %v247
      %v303 = vunpack.c.l.b16 %v248
      %v304 = vunpack.c.l.b16 %v249
      %v305 = vunpack.c.l.b16 %v250
      %v306 = vunpack.c.l.b16 %v251
      %v307 = vunpack.c.l.b16 %v252
      %v308 = vunpack.c.l.b16 %v253
      %v309 = vunpack.c.l.b16 %v254
      %v310 = vunpack.c.l.b16 %v255
      %v311 = vunpack.c.l.b16 %v256
      %v312 = vunpack.c.l.b16 %v257
      %v313 = vunpack.c.l.b16 %v258
      %v314 = vunpack.c.l.b16 %v259
      %v315 = vunpack.c.l.b16 %v260
      %v316 = vunpack.c.l.b16 %v261
      %v317 = vpack.c.b16 %v302, %v301
      %v318 = vpack.c.b16 %v304, %v303
      %v319 = vpack.c.b16 %v306, %v305
      %v320 = vpack.c.b16 %v308, %v307
      %v321 = vpack.c.b16 %v310, %v309
      %v322 = vpack.c.b16 %v312, %v311
      %v323 = vpack.c.b16 %v314, %v313
      %v324 = vpack.c.b16 %v316, %v315
      %v349 = vunpack.c.l.b16 %v262
      %v350 = vunpack.c.l.b16 %v263
      %v351 = vunpack.c.l.b16 %v264
      %v352 = vunpack.c.l.b16 %v265
      %v353 = vunpack.c.l.b16 %v266
      %v354 = vunpack.c.l.b16 %v267
      %v355 = vunpack.c.l.b16 %v268
      %v356 = vunpack.c.l.b16 %v269
      %v357 = vunpack.c.l.b16 %v270
      %v358 = vunpack.c.l.b16 %v271
      %v359 = vunpack.c.l.b16 %v272
      %v360 = vunpack.c.l.b16 %v273
      %v361 = vunpack.c.l.b16 %v274
      %v362 = vunpack.c.l.b16 %v275
      %v363 = vunpack.c.l.b16 %v276
      %v364 = vunpack.c.l.b16 %v277
      %v365 = vpack.c.b16 %v350, %v349
      %v366 = vpack.c.b16 %v352, %v351
      %v367 = vpack.c.b16 %v354, %v353
      %v368 = vpack.c.b16 %v356, %v355
      %v369 = vpack.c.b16 %v358, %v357
      %v370 = vpack.c.b16 %v360, %v359
      %v371 = vpack.c.b16 %v362, %v361
      %v372 = vpack.c.b16 %v364, %v363
      %381 = vmatprep.subr.bf16.mxu0 0
      %382 = vmatpush1.bf16.msra.mxu0 %v372
      %383 = vmatprep.subr.bf16.mxu0 0
      %384 = vmatpush1.bf16.msra.mxu0 %v371
      %385 = vmatprep.subr.bf16.mxu0 0
      %386 = vmatpush1.bf16.msra.mxu0 %v370
      %387 = vmatprep.subr.bf16.mxu0 0
      %388 = vmatpush1.bf16.msra.mxu0 %v369
      %389 = vmatprep.subr.bf16.mxu0 0
      %390 = vmatpush1.bf16.msra.mxu0 %v368
      %391 = vmatprep.subr.bf16.mxu0 0
      %392 = vmatpush1.bf16.msra.mxu0 %v367
      %393 = vmatprep.subr.bf16.mxu0 0
      %394 = vmatpush1.bf16.msra.mxu0 %v366
      %395 = vmatprep.subr.bf16.mxu0 0
      %396 = vmatpush1.bf16.msra.mxu0 %v365
      %397 = vmatprep.subr.bf16.mxu0 0
      %398 = vmatpush2.bf16.msra.mxu0 0
      %399 = vmatprep.subr.bf16.mxu0 0
      %400 = vmatpush2.bf16.msra.mxu0 0
      %401 = vmatprep.subr.bf16.mxu0 0
      %402 = vmatpush2.bf16.msra.mxu0 0
      %403 = vmatprep.subr.bf16.mxu0 0
      %404 = vmatpush2.bf16.msra.mxu0 0
      %405 = vmatprep.subr.bf16.mxu0 0
      %406 = vmatpush2.bf16.msra.mxu0 0
      %407 = vmatprep.subr.bf16.mxu0 0
      %408 = vmatpush2.bf16.msra.mxu0 0
      %409 = vmatprep.subr.bf16.mxu0 0
      %410 = vmatpush2.bf16.msra.mxu0 0
      %411 = vmatprep.subr.bf16.mxu0 0
      %412 = vmatpush2.bf16.msra.mxu0 0
      %413 = vmatprep.mubr.bf16.mxu0 0
      %414 = vmatmul.mubr.bf16.gmra.mxu0 %v317
      %v415 = vpop.f32.mrf.mxu0
      %v416 = vadd.f32 %v283, %v415
      %v417 = vpop.f32.mrf.mxu0
      %v418 = vpop.f32.mrf.mxu0
      %v419 = vadd.f32 %v283, %v418
      %v420 = vpop.f32.mrf.mxu0
      %421 = vmatprep.mubr.bf16.mxu0 0
      %422 = vmatmul.mubr.bf16.gmra.mxu0 %v318
      %v423 = vpop.f32.mrf.mxu0
      %v424 = vadd.f32 %v283, %v423
      %v425 = vpop.f32.mrf.mxu0
      %v426 = vpop.f32.mrf.mxu0
      %v427 = vadd.f32 %v283, %v426
      %v428 = vpop.f32.mrf.mxu0
      %429 = vmatprep.mubr.bf16.mxu0 0
      %430 = vmatmul.mubr.bf16.gmra.mxu0 %v319
      %v431 = vpop.f32.mrf.mxu0
      %v432 = vadd.f32 %v283, %v431
      %v433 = vpop.f32.mrf.mxu0
      %v434 = vpop.f32.mrf.mxu0
      %v435 = vadd.f32 %v283, %v434
      %v436 = vpop.f32.mrf.mxu0
      %437 = vmatprep.mubr.bf16.mxu0 0
      %438 = vmatmul.mubr.bf16.gmra.mxu0 %v320
      %v439 = vpop.f32.mrf.mxu0
      %v440 = vadd.f32 %v283, %v439
      %v441 = vpop.f32.mrf.mxu0
      %v442 = vpop.f32.mrf.mxu0
      %v443 = vadd.f32 %v283, %v442
      %v444 = vpop.f32.mrf.mxu0
      %445 = vmatprep.mubr.bf16.mxu0 0
      %446 = vmatmul.mubr.bf16.gmra.mxu0 %v321
      %v447 = vpop.f32.mrf.mxu0
      %v448 = vadd.f32 %v283, %v447
      %v449 = vpop.f32.mrf.mxu0
      %v450 = vpop.f32.mrf.mxu0
      %v451 = vadd.f32 %v283, %v450
      %v452 = vpop.f32.mrf.mxu0
      %453 = vmatprep.mubr.bf16.mxu0 0
      %454 = vmatmul.mubr.bf16.gmra.mxu0 %v322
      %v455 = vpop.f32.mrf.mxu0
      %v456 = vadd.f32 %v283, %v455
      %v457 = vpop.f32.mrf.mxu0
      %v458 = vpop.f32.mrf.mxu0
      %v459 = vadd.f32 %v283, %v458
      %v460 = vpop.f32.mrf.mxu0
      %461 = vmatprep.mubr.bf16.mxu0 0
      %462 = vmatmul.mubr.bf16.gmra.mxu0 %v323
      %v463 = vpop.f32.mrf.mxu0
      %v464 = vadd.f32 %v283, %v463
      %v465 = vpop.f32.mrf.mxu0
      %v466 = vpop.f32.mrf.mxu0
      %v467 = vadd.f32 %v283, %v466
      %v468 = vpop.f32.mrf.mxu0
      %469 = vmatprep.mubr.bf16.mxu0 0
      %470 = vmatmul.mubr.bf16.gmra.mxu0 %v324
      %v471 = vpop.f32.mrf.mxu0
      %v472 = vadd.f32 %v283, %v471
      %v473 = vpop.f32.mrf.mxu0
      %v474 = vpop.f32.mrf.mxu0
      %v475 = vadd.f32 %v283, %v474
      %v476 = vpop.f32.mrf.mxu0
      %477 = vdwg.mxu0
      %vm478 = vcmp.gt.f32.partialorder %v416, 0.0
      %vm479 = vcmp.gt.f32.partialorder %v419, 0.0
      %vm480 = vcmp.gt.f32.partialorder %v424, 0.0
      %vm481 = vcmp.gt.f32.partialorder %v427, 0.0
      %vm482 = vcmp.gt.f32.partialorder %v432, 0.0
      %vm483 = vcmp.gt.f32.partialorder %v435, 0.0
      %vm484 = vcmp.gt.f32.partialorder %v440, 0.0
      %vm485 = vcmp.gt.f32.partialorder %v443, 0.0
      %vm486 = vcmp.gt.f32.partialorder %v448, 0.0
      %vm487 = vcmp.gt.f32.partialorder %v451, 0.0
      %vm488 = vcmp.gt.f32.partialorder %v456, 0.0
      %vm489 = vcmp.gt.f32.partialorder %v459, 0.0
      %vm490 = vcmp.gt.f32.partialorder %v464, 0.0
      %vm491 = vcmp.gt.f32.partialorder %v467, 0.0
      %vm492 = vcmp.gt.f32.partialorder %v472, 0.0
      %vm493 = vcmp.gt.f32.partialorder %v475, 0.0
      %v494 = vmul.f32 %v416, 0.2
      %v495 = vmul.f32 %v419, 0.2
      %v496 = vmul.f32 %v424, 0.2
      %v497 = vmul.f32 %v427, 0.2
      %v498 = vmul.f32 %v432, 0.2
      %v499 = vmul.f32 %v435, 0.2
      %v500 = vmul.f32 %v440, 0.2
      %v501 = vmul.f32 %v443, 0.2
      %v502 = vmul.f32 %v448, 0.2
      %v503 = vmul.f32 %v451, 0.2
      %v504 = vmul.f32 %v456, 0.2
      %v505 = vmul.f32 %v459, 0.2
      %v506 = vmul.f32 %v464, 0.2
      %v507 = vmul.f32 %v467, 0.2
      %v508 = vmul.f32 %v472, 0.2
      %v509 = vmul.f32 %v475, 0.2
      %v510 = vsel %vm478, %v416, %v494
      %v511 = vsel %vm479, %v419, %v495
      %v512 = vsel %vm480, %v424, %v496
      %v513 = vsel %vm481, %v427, %v497
      %v514 = vsel %vm482, %v432, %v498
      %v515 = vsel %vm483, %v435, %v499
      %v516 = vsel %vm484, %v440, %v500
      %v517 = vsel %vm485, %v443, %v501
      %v518 = vsel %vm486, %v448, %v502
      %v519 = vsel %vm487, %v451, %v503
      %v520 = vsel %vm488, %v456, %v504
      %v521 = vsel %vm489, %v459, %v505
      %v522 = vsel %vm490, %v464, %v506
      %v523 = vsel %vm491, %v467, %v507
      %v524 = vsel %vm492, %v472, %v508
      %v525 = vsel %vm493, %v475, %v509
      %526 = vst [vmem:[%s237] sm:$0xff] %v510
      %527 = vst [vmem:[%s237 + $0x8] sm:$0xff] %v511
      %528 = vst [vmem:[%s237 + $0x10] sm:$0xff] %v512
      %529 = vst [vmem:[%s237 + $0x18] sm:$0xff] %v513
      %530 = vst [vmem:[%s237 + $0x20] sm:$0xff] %v514
      %531 = vst [vmem:[%s237 + $0x28] sm:$0xff] %v515
      %532 = vst [vmem:[%s237 + $0x30] sm:$0xff] %v516
      %533 = vst [vmem:[%s237 + $0x38] sm:$0xff] %v517
      %534 = vst [vmem:[%s237 + $0x40] sm:$0xff] %v518
      %535 = vst [vmem:[%s237 + $0x48] sm:$0xff] %v519
      %536 = vst [vmem:[%s237 + $0x50] sm:$0xff] %v520
      %537 = vst [vmem:[%s237 + $0x58] sm:$0xff] %v521
      %538 = vst [vmem:[%s237 + $0x60] sm:$0xff] %v522
      %539 = vst [vmem:[%s237 + $0x68] sm:$0xff] %v523
      %540 = vst [vmem:[%s237 + $0x70] sm:$0xff] %v524
      %541 = vst [vmem:[%s237 + $0x78] sm:$0xff] %v525
      %s542 = smul.u32 %s17, 128
      %v543 = vlaneseq
      %v544 = vshrl.u32 %v543, 7
      %v545 = vadd.s32 %v544, 8
      %v546 = vadd.s32 %v544, 16
      %v547 = vadd.s32 %v544, 24
      %v548 = vadd.s32 %v544, 32
      %v549 = vadd.s32 %v544, 40
      %v550 = vadd.s32 %v544, 48
      %v551 = vadd.s32 %v544, 56
      %v552 = vadd.s32 %v544, 64
      %v553 = vadd.s32 %v544, 72
      %v554 = vadd.s32 %v544, 80
      %v555 = vadd.s32 %v544, 88
      %v556 = vadd.s32 %v544, 96
      %v557 = vadd.s32 %v544, 104
      %v558 = vadd.s32 %v544, 112
      %v559 = vadd.s32 %v544, 120
      %v560 = vstv %s542
      %v561 = vadd.s32 %v560, %v544
      %v562 = vadd.s32 %v560, %v545
      %v563 = vadd.s32 %v560, %v546
      %v564 = vadd.s32 %v560, %v547
      %v565 = vadd.s32 %v560, %v548
      %v566 = vadd.s32 %v560, %v549
      %v567 = vadd.s32 %v560, %v550
      %v568 = vadd.s32 %v560, %v551
      %v569 = vadd.s32 %v560, %v552
      %v570 = vadd.s32 %v560, %v553
      %v571 = vadd.s32 %v560, %v554
      %v572 = vadd.s32 %v560, %v555
      %v573 = vadd.s32 %v560, %v556
      %v574 = vadd.s32 %v560, %v557
      %v575 = vadd.s32 %v560, %v558
      %v576 = vadd.s32 %v560, %v559
      %vm577 = vcmp.lt.s32.totalorder %v561, 512
      %vm578 = vcmp.lt.s32.totalorder %v562, 512
      %vm579 = vcmp.lt.s32.totalorder %v563, 512
      %vm580 = vcmp.lt.s32.totalorder %v564, 512
      %vm581 = vcmp.lt.s32.totalorder %v565, 512
      %vm582 = vcmp.lt.s32.totalorder %v566, 512
      %vm583 = vcmp.lt.s32.totalorder %v567, 512
      %vm584 = vcmp.lt.s32.totalorder %v568, 512
      %vm585 = vcmp.lt.s32.totalorder %v569, 512
      %vm586 = vcmp.lt.s32.totalorder %v570, 512
      %vm587 = vcmp.lt.s32.totalorder %v571, 512
      %vm588 = vcmp.lt.s32.totalorder %v572, 512
      %vm589 = vcmp.lt.s32.totalorder %v573, 512
      %vm590 = vcmp.lt.s32.totalorder %v574, 512
      %vm591 = vcmp.lt.s32.totalorder %v575, 512
      %vm592 = vcmp.lt.s32.totalorder %v576, 512
      %v593 = vsel %vm577, 1, 0
      %v594 = vsel %vm578, 1, 0
      %v595 = vsel %vm579, 1, 0
      %v596 = vsel %vm580, 1, 0
      %v597 = vsel %vm581, 1, 0
      %v598 = vsel %vm582, 1, 0
      %v599 = vsel %vm583, 1, 0
      %v600 = vsel %vm584, 1, 0
      %v601 = vsel %vm585, 1, 0
      %v602 = vsel %vm586, 1, 0
      %v603 = vsel %vm587, 1, 0
      %v604 = vsel %vm588, 1, 0
      %v605 = vsel %vm589, 1, 0
      %v606 = vsel %vm590, 1, 0
      %v607 = vsel %vm591, 1, 0
      %v608 = vsel %vm592, 1, 0
      %vm609 = vcmp.eq.s32.totalorder %v593, 1
      %vm610 = vcmp.eq.s32.totalorder %v594, 1
      %vm611 = vcmp.eq.s32.totalorder %v595, 1
      %vm612 = vcmp.eq.s32.totalorder %v596, 1
      %vm613 = vcmp.eq.s32.totalorder %v597, 1
      %vm614 = vcmp.eq.s32.totalorder %v598, 1
      %vm615 = vcmp.eq.s32.totalorder %v599, 1
      %vm616 = vcmp.eq.s32.totalorder %v600, 1
      %vm617 = vcmp.eq.s32.totalorder %v601, 1
      %vm618 = vcmp.eq.s32.totalorder %v602, 1
      %vm619 = vcmp.eq.s32.totalorder %v603, 1
      %vm620 = vcmp.eq.s32.totalorder %v604, 1
      %vm621 = vcmp.eq.s32.totalorder %v605, 1
      %vm622 = vcmp.eq.s32.totalorder %v606, 1
      %vm623 = vcmp.eq.s32.totalorder %v607, 1
      %vm624 = vcmp.eq.s32.totalorder %v608, 1
      %v625 = vsel %vm609, %v510, 0.0
      %v626 = vsel %vm610, %v511, 0.0
      %v627 = vsel %vm611, %v512, 0.0
      %v628 = vsel %vm612, %v513, 0.0
      %v629 = vsel %vm613, %v514, 0.0
      %v630 = vsel %vm614, %v515, 0.0
      %v631 = vsel %vm615, %v516, 0.0
      %v632 = vsel %vm616, %v517, 0.0
      %v633 = vsel %vm617, %v518, 0.0
      %v634 = vsel %vm618, %v519, 0.0
      %v635 = vsel %vm619, %v520, 0.0
      %v636 = vsel %vm620, %v521, 0.0
      %v637 = vsel %vm621, %v522, 0.0
      %v638 = vsel %vm622, %v523, 0.0
      %v639 = vsel %vm623, %v524, 0.0
      %v640 = vsel %vm624, %v525, 0.0
      %v641 = vadd.f32 %v625, %v626
      %v642 = vadd.f32 %v641, %v627
      %v643 = vadd.f32 %v642, %v628
      %v644 = vadd.f32 %v643, %v629
      %v645 = vadd.f32 %v644, %v630
      %v646 = vadd.f32 %v645, %v631
      %v647 = vadd.f32 %v646, %v632
      %v648 = vadd.f32 %v647, %v633
      %v649 = vadd.f32 %v648, %v634
      %v650 = vadd.f32 %v649, %v635
      %v651 = vadd.f32 %v650, %v636
      %v652 = vadd.f32 %v651, %v637
      %v653 = vadd.f32 %v652, %v638
      %v654 = vadd.f32 %v653, %v639
      %v655 = vadd.f32 %v654, %v640
      %v656 = vrot.slane %v655, 4
      %v657 = vadd.f32 %v655, %v656
      %v658 = vrot.slane %v657, 2
      %v659 = vadd.f32 %v657, %v658
      %v660 = vrot.slane %v659, 1
      %v661 = vadd.f32 %v659, %v660
      %v662 = vmul.f32 %v625, %v625
      %v663 = vmul.f32 %v626, %v626
      %v664 = vmul.f32 %v627, %v627
      %v665 = vmul.f32 %v628, %v628
      %v666 = vmul.f32 %v629, %v629
      %v667 = vmul.f32 %v630, %v630
      %v668 = vmul.f32 %v631, %v631
      %v669 = vmul.f32 %v632, %v632
      %v670 = vmul.f32 %v633, %v633
      %v671 = vmul.f32 %v634, %v634
      %v672 = vmul.f32 %v635, %v635
      %v673 = vmul.f32 %v636, %v636
      %v674 = vmul.f32 %v637, %v637
      %v675 = vmul.f32 %v638, %v638
      %v676 = vmul.f32 %v639, %v639
      %v677 = vmul.f32 %v640, %v640
      %v678 = vadd.f32 %v662, %v663
      %v679 = vadd.f32 %v678, %v664
      %v680 = vadd.f32 %v679, %v665
      %v681 = vadd.f32 %v680, %v666
      %v682 = vadd.f32 %v681, %v667
      %v683 = vadd.f32 %v682, %v668
      %v684 = vadd.f32 %v683, %v669
      %v685 = vadd.f32 %v684, %v670
      %v686 = vadd.f32 %v685, %v671
      %v687 = vadd.f32 %v686, %v672
      %v688 = vadd.f32 %v687, %v673
      %v689 = vadd.f32 %v688, %v674
      %v690 = vadd.f32 %v689, %v675
      %v691 = vadd.f32 %v690, %v676
      %v692 = vadd.f32 %v691, %v677
      %v693 = vrot.slane %v692, 4
      %v694 = vadd.f32 %v692, %v693
      %v695 = vrot.slane %v694, 2
      %v696 = vadd.f32 %v694, %v695
      %v697 = vrot.slane %v696, 1
      %v698 = vadd.f32 %v696, %v697
      %699 = vst [vmem:[%s241] sm:$0x1] %v661
      %700 = vst [vmem:[%s244] sm:$0x1] %v698
      %s701 = smul.u32 16, %s17
      %p702 = scmp.lt.s32.totalorder %s701, 63
      %s703 = scalar_select %p702, %s701, 63
      %s704 = smul.addr %s703, 8
      %s705 = scalar_lea.vmem %s3, %s704
      %p706 = scmp.lt.s32.totalorder %s17, 3
      %s707 = scalar_select %p706, %s17, 3
      %s708 = scalar_lea.vmem %s4, %s707
      %p709 = scmp.lt.s32.totalorder %s17, 3
      %s710 = scalar_select %p709, %s17, 3
      %s711 = scalar_lea.vmem %s5, %s710
      // Predicated region
      $region33: #{residual_block_forward.4} parent=31 // pred_check
        %p712 = pneg %p103
      $region34: #{residual_block_forward.4} parent=31 // pred_check_branch
        %714 = sbr.rel (%p712) target = $region36
      $region35: #{residual_block_forward.4} parent=31 // pred_region
        %s715 = smul.u32 16, %s17
      $region36: #{residual_block_forward.4} parent=31 // pred_fallthru
        _
      // Predicated region
      $region37: #{residual_block_forward.4} parent=31 // pred_check
        %p716 = pneg %p129
      $region38: #{residual_block_forward.4} parent=31 // pred_check_branch
        %718 = sbr.rel (%p716) target = $region40
      $region39: #{residual_block_forward.4} parent=31 // pred_region
        _
      $region40: #{residual_block_forward.4} parent=31 // pred_fallthru
        _
      // Predicated region
      $region41: #{residual_block_forward.4} parent=31 // pred_check
        %p719 = pneg %p155
      $region42: #{residual_block_forward.4} parent=31 // pred_check_branch
        %721 = sbr.rel (%p719) target = $region44
      $region43: #{residual_block_forward.4} parent=31 // pred_region
        _
      $region44: #{residual_block_forward.4} parent=31 // pred_fallthru
        _
    $region32: #{residual_block_forward.4} parent=5 // pred_fallthru
      _
    %p722 = scmp.le.s32.totalorder 2, %s12
    // Predicated region
    $region45: #{residual_block_forward.4} parent=5 // pred_check
      %p723 = pneg %p722
    $region46: #{residual_block_forward.4} parent=5 // pred_check_branch
      %725 = sbr.rel (%p723) target = $region48
    $region47: #{residual_block_forward.4} parent=5 // pred_region
      %s726 = ssub.s32 %s12, 2
      // Predicated region
      $region49: #{residual_block_forward.4} parent=47 // pred_check
        %p727 = pneg %p109
      $region50: #{residual_block_forward.4} parent=47 // pred_check_branch
        %729 = sbr.rel (%p727) target = $region52
      $region51: #{residual_block_forward.4} parent=47 // pred_region
        %s730 = smul.u32 16, %s18
        %p731 = scmp.lt.s32.totalorder %s730, 63
        %s732 = scalar_select %p731, %s730, 63
        %s733 = smul.addr %s732, 8
        %s734 = scalar_lea.vmem %s3, %s733
      $region52: #{residual_block_forward.4} parent=47 // pred_fallthru
        _
      // Predicated region
      $region53: #{residual_block_forward.4} parent=47 // pred_check
        %p735 = pneg %p135
      $region54: #{residual_block_forward.4} parent=47 // pred_check_branch
        %737 = sbr.rel (%p735) target = $region56
      $region55: #{residual_block_forward.4} parent=47 // pred_region
        %p738 = scmp.lt.s32.totalorder %s18, 3
        %s739 = scalar_select %p738, %s18, 3
        %s740 = scalar_lea.vmem %s4, %s739
      $region56: #{residual_block_forward.4} parent=47 // pred_fallthru
        _
      // Predicated region
      $region57: #{residual_block_forward.4} parent=47 // pred_check
        %p741 = pneg %p161
      $region58: #{residual_block_forward.4} parent=47 // pred_check_branch
        %743 = sbr.rel (%p741) target = $region60
      $region59: #{residual_block_forward.4} parent=47 // pred_region
        %p744 = scmp.lt.s32.totalorder %s18, 3
        %s745 = scalar_select %p744, %s18, 3
        %s746 = scalar_lea.vmem %s5, %s745
      $region60: #{residual_block_forward.4} parent=47 // pred_fallthru
        _
    $region48: #{residual_block_forward.4} parent=5 // pred_fallthru
      _
  $region6: #{residual_block_forward.4} parent=0 // loop_footer
    %s16 = sadd.s32 1, %s12
  $region7: #{residual_block_forward.4} parent=0 // loop_footer_branch
    %11 = sbr.rel target = $region3
  $region8: #{residual_block_forward.4} parent=0 // loop_exit
    _

// kernel: residual_block_forward.7
$region0: #{residual_block_forward.7}
  #allocation0 [shape = 'u32[]', space=smem, size = 0x4, offset = 0x4, fixed_abs, tag = 'smem constant byte address 0x4 - core index']
  #allocation1 [shape = 'u32[144,128]{1,0:T(1,128)}', space=vmem, size = 0x12000, scoped, tag = 'internal scratch']
  %s0 = inlined_call_operand.vmem [shape: f32[512,128], index: 0, kind: input, shape index: {}]
  %s1 = inlined_call_operand.vmem [shape: f32[1,128], index: 1, kind: input, shape index: {}]
  %s2 = inlined_call_operand.vmem [shape: f32[1,128], index: 2, kind: input, shape index: {}]
  %s3 = inlined_call_operand.vmem [shape: f32[512,128], index: 3, kind: output, shape index: {}]
  %s4 = sld [smem:[#allocation0]]
  $region45: #{residual_block_forward.7} parent=0
    _
  %s6 = ssub.s32 1, %s4
  %s7 = scalar_select 0, %s6, %s4
  loop: start=0, step=1, limit=6
  $region2: #{residual_block_forward.7} parent=0 // loop_pre_header
    _
  $region3: #{residual_block_forward.7} parent=0 // loop_header
    %s9 = sphi 0, %s13
    %p10 = scmp.ge.s32.totalorder %s9, 6
    %s19 = sphi 0, %s21
    %s22 = sphi 0, %s19
    %s23 = sphi 0, %s22
    %s39 = sphi 0, %s23
    %s43 = sphi 0, %s43
    %s45 = sphi 0, %s43
    %s46 = sphi 0, %s45
    %s60 = sphi 0, %s46
    %s64 = sphi 0, %s64
    %s66 = sphi 0, %s64
    %s67 = sphi 0, %s66
    %s81 = sphi 0, %s67
    %s87 = sphi 0, %s89
    %s90 = sphi 0, %s87
    %s91 = sphi 0, %s90
    %s107 = sphi 0, %s91
  $region4: #{residual_block_forward.7} parent=0 // loop_header_branch
    %12 = sbr.rel (%p10) target = $region8
  $region5: #{residual_block_forward.7} parent=0 // loop_body
    %s14 = ssub.s32 %s9, 1
    %s15 = ssub.s32 %s9, 2
    %s16 = sadd.s32 %s9, 1
    %s17 = ssub.s32 %s9, %s16
    %p18 = scmp.eq.s32.totalorder %s17, 0
    %s20 = sadd.s32 %s19, 1
    %s21 = scalar_select %p18, %s19, %s20
    %p24 = pneg %p18
    %p25 = scmp.eq.s32.totalorder %s9, 3
    %p26 = por %p24, %p25
    %p27 = scmp.ne.s32.totalorder %s19, %s22
    %p28 = scmp.eq.s32.totalorder %s9, 0
    %p29 = por %p27, %p28
    %p30 = scmp.ne.s32.totalorder %s19, %s22
    %p31 = scmp.eq.s32.totalorder %s14, 3
    %p32 = por %p30, %p31
    %p33 = scmp.ne.s32.totalorder %s22, %s23
    %p34 = scmp.eq.s32.totalorder %s14, 0
    %p35 = por %p33, %p34
    %p36 = scmp.ne.s32.totalorder %s22, %s23
    %p37 = scmp.eq.s32.totalorder %s15, 3
    %p38 = por %p36, %p37
    %p40 = scmp.ne.s32.totalorder %s23, %s39
    %p41 = scmp.eq.s32.totalorder %s15, 0
    %p42 = por %p40, %p41
    %s44 = sadd.s32 %s43, 1
    %p47 = scmp.eq.s32.totalorder %s9, 3
    %p48 = scmp.ne.s32.totalorder %s43, %s45
    %p49 = scmp.eq.s32.totalorder %s9, 0
    %p50 = por %p48, %p49
    %p51 = scmp.ne.s32.totalorder %s43, %s45
    %p52 = scmp.eq.s32.totalorder %s14, 3
    %p53 = por %p51, %p52
    %p54 = scmp.ne.s32.totalorder %s45, %s46
    %p55 = scmp.eq.s32.totalorder %s14, 0
    %p56 = por %p54, %p55
    %p57 = scmp.ne.s32.totalorder %s45, %s46
    %p58 = scmp.eq.s32.totalorder %s15, 3
    %p59 = por %p57, %p58
    %p61 = scmp.ne.s32.totalorder %s46, %s60
    %p62 = scmp.eq.s32.totalorder %s15, 0
    %p63 = por %p61, %p62
    %s65 = sadd.s32 %s64, 1
    %p68 = scmp.eq.s32.totalorder %s9, 3
    %p69 = scmp.ne.s32.totalorder %s64, %s66
    %p70 = scmp.eq.s32.totalorder %s9, 0
    %p71 = por %p69, %p70
    %p72 = scmp.ne.s32.totalorder %s64, %s66
    %p73 = scmp.eq.s32.totalorder %s14, 3
    %p74 = por %p72, %p73
    %p75 = scmp.ne.s32.totalorder %s66, %s67
    %p76 = scmp.eq.s32.totalorder %s14, 0
    %p77 = por %p75, %p76
    %p78 = scmp.ne.s32.totalorder %s66, %s67
    %p79 = scmp.eq.s32.totalorder %s15, 3
    %p80 = por %p78, %p79
    %p82 = scmp.ne.s32.totalorder %s67, %s81
    %p83 = scmp.eq.s32.totalorder %s15, 0
    %p84 = por %p82, %p83
    %s85 = ssub.s32 %s9, %s16
    %p86 = scmp.eq.s32.totalorder %s85, 0
    %s88 = sadd.s32 %s87, 1
    %s89 = scalar_select %p86, %s87, %s88
    %p92 = pneg %p86
    %p93 = scmp.eq.s32.totalorder %s9, 3
    %p94 = por %p92, %p93
    %p95 = scmp.ne.s32.totalorder %s87, %s90
    %p96 = scmp.eq.s32.totalorder %s9, 0
    %p97 = por %p95, %p96
    %p98 = scmp.ne.s32.totalorder %s87, %s90
    %p99 = scmp.eq.s32.totalorder %s14, 3
    %p100 = por %p98, %p99
    %p101 = scmp.ne.s32.totalorder %s90, %s91
    %p102 = scmp.eq.s32.totalorder %s14, 0
    %p103 = por %p101, %p102
    %p104 = scmp.ne.s32.totalorder %s90, %s91
    %p105 = scmp.eq.s32.totalorder %s15, 3
    %p106 = por %p104, %p105
    %p108 = scmp.ne.s32.totalorder %s91, %s107
    %p109 = scmp.eq.s32.totalorder %s15, 0
    %p110 = por %p108, %p109
    %p111 = scmp.le.s32.totalorder 1, %s9
    %p112 = scmp.lt.s32.totalorder %s9, 5
    %p113 = pnand %p111, %p112
    %p114 = pneg %p113
    // Predicated region
    $region9: #{residual_block_forward.7} parent=5 // pred_check
      _
    $region10: #{residual_block_forward.7} parent=5 // pred_check_branch
      %116 = sbr.rel (%p113) target = $region12
    $region11: #{residual_block_forward.7} parent=5 // pred_region
      %s117 = ssub.s32 %s9, 1
      // Predicated region
      $region13: #{residual_block_forward.7} parent=11 // pred_check
        %p118 = pneg %p56
      $region14: #{residual_block_forward.7} parent=11 // pred_check_branch
        %120 = sbr.rel (%p118) target = $region16
      $region15: #{residual_block_forward.7} parent=11 // pred_region
        _
      $region16: #{residual_block_forward.7} parent=11 // pred_fallthru
        _
      // Predicated region
      $region17: #{residual_block_forward.7} parent=11 // pred_check
        %p121 = pneg %p77
      $region18: #{residual_block_forward.7} parent=11 // pred_check_branch
        %123 = sbr.rel (%p121) target = $region20
      $region19: #{residual_block_forward.7} parent=11 // pred_region
        _
      $region20: #{residual_block_forward.7} parent=11 // pred_fallthru
        _
    $region12: #{residual_block_forward.7} parent=5 // pred_fallthru
      _
    %p124 = scmp.lt.s32.totalorder %s9, 4
    // Predicated region
    $region21: #{residual_block_forward.7} parent=5 // pred_check
      %p125 = pneg %p124
    $region22: #{residual_block_forward.7} parent=5 // pred_check_branch
      %127 = sbr.rel (%p125) target = $region24
    $region23: #{residual_block_forward.7} parent=5 // pred_region
      // Predicated region
      $region25: #{residual_block_forward.7} parent=23 // pred_check
        %p128 = pneg %p29
      $region26: #{residual_block_forward.7} parent=23 // pred_check_branch
        %130 = sbr.rel (%p128) target = $region28
      $region27: #{residual_block_forward.7} parent=23 // pred_region
        %s131 = smul.u32 16, %s9
        %p132 = scmp.lt.s32.totalorder %s131, 63
        %s133 = scalar_select %p132, %s131, 63
        %s134 = smul.addr %s133, 8
        %s135 = scalar_lea.vmem %s0, %s134
        %s136 = smul.u32 16, %s9
      $region28: #{residual_block_forward.7} parent=23 // pred_fallthru
        _
    $region24: #{residual_block_forward.7} parent=5 // pred_fallthru
      _
    %p137 = scmp.le.s32.totalorder 1, %s9
    %p138 = scmp.lt.s32.totalorder %s9, 5
    %p139 = pnand %p137, %p138
    %p140 = pneg %p139
    // Predicated region
    $region29: #{residual_block_forward.7} parent=5 // pred_check
      _
    $region30: #{residual_block_forward.7} parent=5 // pred_check_branch
      %142 = sbr.rel (%p139) target = $region32
    $region31: #{residual_block_forward.7} parent=5 // pred_region
      %s143 = ssub.s32 %s9, 1
      %s144 = smul.u32 16, %s14
      %p145 = scmp.lt.s32.totalorder %s144, 63
      %s146 = scalar_select %p145, %s144, 63
      %s147 = smul.addr %s146, 8
      %s148 = scalar_lea.vmem %s0, %s147
      %p149 = pneg %p35
      %p150 = pneg %p32
      %p151 = pneg %p56
      %p152 = pneg %p53
      %p153 = pneg %p77
      %p154 = pneg %p74
      %p155 = pneg %p103
      %p156 = pneg %p100
      %s157 = smul.u32 16, %s14
      %p158 = scmp.lt.s32.totalorder %s157, 63
      %s159 = scalar_select %p158, %s157, 63
      %s160 = smul.addr %s159, 8
      %s161 = scalar_lea.vmem %s3, %s160
      %s162 = smul.u32 16, %s14
      %p163 = scmp.lt.s32.totalorder %s162, 63
      %s164 = scalar_select %p163, %s162, 63
      %s165 = smul.addr %s164, 8
      %s166 = scalar_lea.vmem %s0, %s165
      %s167 = smul.u32 16, %s14
      %s168 = smul.u32 16, %s14
      %p169 = scmp.lt.s32.totalorder %s168, 63
      %s170 = scalar_select %p169, %s168, 63
      %s171 = smul.addr %s170, 8
      %s172 = scalar_lea.vmem %s3, %s171
      %s173 = smul.u32 16, %s14
      %v174 = vld [vmem:[%s166] sm:$0xff]
      %v175 = vld [vmem:[%s166 + $0x8] sm:$0xff]
      %v176 = vld [vmem:[%s166 + $0x10] sm:$0xff]
      %v177 = vld [vmem:[%s166 + $0x18] sm:$0xff]
      %v178 = vld [vmem:[%s166 + $0x20] sm:$0xff]
      %v179 = vld [vmem:[%s166 + $0x28] sm:$0xff]
      %v180 = vld [vmem:[%s166 + $0x30] sm:$0xff]
      %v181 = vld [vmem:[%s166 + $0x38] sm:$0xff]
      %v182 = vld [vmem:[%s166 + $0x40] sm:$0xff]
      %v183 = vld [vmem:[%s166 + $0x48] sm:$0xff]
      %v184 = vld [vmem:[%s166 + $0x50] sm:$0xff]
      %v185 = vld [vmem:[%s166 + $0x58] sm:$0xff]
      %v186 = vld [vmem:[%s166 + $0x60] sm:$0xff]
      %v187 = vld [vmem:[%s166 + $0x68] sm:$0xff]
      %v188 = vld [vmem:[%s166 + $0x70] sm:$0xff]
      %v189 = vld [vmem:[%s166 + $0x78] sm:$0xff]
      %v190 = vld [vmem:[%s1] sm:$0x1]
      %v192 = vlaneseq
      %v193 = vshrl.u32 %v192, 7
      %v194 = vsub.s32 0, %v193
      %v195 = vrot.slane %v190, %v194
      %v197 = vmul.f32 %v174, %v195
      %v198 = vmul.f32 %v175, %v195
      %v199 = vmul.f32 %v176, %v195
      %v200 = vmul.f32 %v177, %v195
      %v201 = vmul.f32 %v178, %v195
      %v202 = vmul.f32 %v179, %v195
      %v203 = vmul.f32 %v180, %v195
      %v204 = vmul.f32 %v181, %v195
      %v205 = vmul.f32 %v182, %v195
      %v206 = vmul.f32 %v183, %v195
      %v207 = vmul.f32 %v184, %v195
      %v208 = vmul.f32 %v185, %v195
      %v209 = vmul.f32 %v186, %v195
      %v210 = vmul.f32 %v187, %v195
      %v211 = vmul.f32 %v188, %v195
      %v212 = vmul.f32 %v189, %v195
      %v213 = vld [vmem:[%s2] sm:$0x1]
      %v215 = vlaneseq
      %v216 = vshrl.u32 %v215, 7
      %v217 = vsub.s32 0, %v216
      %v218 = vrot.slane %v213, %v217
      %v220 = vadd.f32 %v197, %v218
      %v221 = vadd.f32 %v198, %v218
      %v222 = vadd.f32 %v199, %v218
      %v223 = vadd.f32 %v200, %v218
      %v224 = vadd.f32 %v201, %v218
      %v225 = vadd.f32 %v202, %v218
      %v226 = vadd.f32 %v203, %v218
      %v227 = vadd.f32 %v204, %v218
      %v228 = vadd.f32 %v205, %v218
      %v229 = vadd.f32 %v206, %v218
      %v230 = vadd.f32 %v207, %v218
      %v231 = vadd.f32 %v208, %v218
      %v232 = vadd.f32 %v209, %v218
      %v233 = vadd.f32 %v210, %v218
      %v234 = vadd.f32 %v211, %v218
      %v235 = vadd.f32 %v212, %v218
      %236 = vst [vmem:[%s172] sm:$0xff] %v220
      %237 = vst [vmem:[%s172 + $0x8] sm:$0xff] %v221
      %238 = vst [vmem:[%s172 + $0x10] sm:$0xff] %v222
      %239 = vst [vmem:[%s172 + $0x18] sm:$0xff] %v223
      %240 = vst [vmem:[%s172 + $0x20] sm:$0xff] %v224
      %241 = vst [vmem:[%s172 + $0x28] sm:$0xff] %v225
      %242 = vst [vmem:[%s172 + $0x30] sm:$0xff] %v226
      %243 = vst [vmem:[%s172 + $0x38] sm:$0xff] %v227
      %244 = vst [vmem:[%s172 + $0x40] sm:$0xff] %v228
      %245 = vst [vmem:[%s172 + $0x48] sm:$0xff] %v229
      %246 = vst [vmem:[%s172 + $0x50] sm:$0xff] %v230
      %247 = vst [vmem:[%s172 + $0x58] sm:$0xff] %v231
      %248 = vst [vmem:[%s172 + $0x60] sm:$0xff] %v232
      %249 = vst [vmem:[%s172 + $0x68] sm:$0xff] %v233
      %250 = vst [vmem:[%s172 + $0x70] sm:$0xff] %v234
      %251 = vst [vmem:[%s172 + $0x78] sm:$0xff] %v235
      %s252 = smul.u32 16, %s14
      %p253 = scmp.lt.s32.totalorder %s252, 63
      %s254 = scalar_select %p253, %s252, 63
      %s255 = smul.addr %s254, 8
      %s256 = scalar_lea.vmem %s3, %s255
      // Predicated region
      $region33: #{residual_block_forward.7} parent=31 // pred_check
        %p257 = pneg %p100
      $region34: #{residual_block_forward.7} parent=31 // pred_check_branch
        %259 = sbr.rel (%p257) target = $region36
      $region35: #{residual_block_forward.7} parent=31 // pred_region
        %s260 = smul.u32 16, %s14
      $region36: #{residual_block_forward.7} parent=31 // pred_fallthru
        _
    $region32: #{residual_block_forward.7} parent=5 // pred_fallthru
      _
    %p261 = scmp.le.s32.totalorder 2, %s9
    // Predicated region
    $region37: #{residual_block_forward.7} parent=5 // pred_check
      %p262 = pneg %p261
    $region38: #{residual_block_forward.7} parent=5 // pred_check_branch
      %264 = sbr.rel (%p262) target = $region40
    $region39: #{residual_block_forward.7} parent=5 // pred_region
      %s265 = ssub.s32 %s9, 2
      // Predicated region
      $region41: #{residual_block_forward.7} parent=39 // pred_check
        %p266 = pneg %p106
      $region42: #{residual_block_forward.7} parent=39 // pred_check_branch
        %268 = sbr.rel (%p266) target = $region44
      $region43: #{residual_block_forward.7} parent=39 // pred_region
        %s269 = smul.u32 16, %s15
        %p270 = scmp.lt.s32.totalorder %s269, 63
        %s271 = scalar_select %p270, %s269, 63
        %s272 = smul.addr %s271, 8
        %s273 = scalar_lea.vmem %s3, %s272
      $region44: #{residual_block_forward.7} parent=39 // pred_fallthru
        _
    $region40: #{residual_block_forward.7} parent=5 // pred_fallthru
      _
  $region6: #{residual_block_forward.7} parent=0 // loop_footer
    %s13 = sadd.s32 1, %s9
  $region7: #{residual_block_forward.7} parent=0 // loop_footer_branch
    %8 = sbr.rel target = $region3
  $region8: #{residual_block_forward.7} parent=0 // loop_exit
    _

// kernel: residual_block_forward.6
$region0: #{residual_block_forward.6}
  #allocation0 [shape = 'u32[]', space=smem, size = 0x4, offset = 0x4, fixed_abs, tag = 'smem constant byte address 0x4 - core index']
  #allocation1 [shape = 'u32[144,128]{1,0:T(1,128)}', space=vmem, size = 0x12000, scoped, tag = 'internal scratch']
  %s0 = inlined_call_operand.vmem [shape: bf16[512,128], index: 0, kind: input, shape index: {}]
  %s1 = inlined_call_operand.vmem [shape: bf16[128,128], index: 1, kind: input, shape index: {}]
  %s2 = inlined_call_operand.vmem [shape: f32[1,128], index: 2, kind: input, shape index: {}]
  %s3 = inlined_call_operand.vmem [shape: bf16[512,128], index: 3, kind: input, shape index: {}]
  %s4 = inlined_call_operand.vmem [shape: bf16[128,128], index: 4, kind: input, shape index: {}]
  %s5 = inlined_call_operand.vmem [shape: f32[1,128], index: 5, kind: input, shape index: {}]
  %s6 = inlined_call_operand.vmem [shape: f32[512,128], index: 6, kind: output, shape index: {0}]
  %s7 = inlined_call_operand.vmem [shape: f32[4,1,128], index: 7, kind: output, shape index: {1}]
  %s8 = inlined_call_operand.vmem [shape: f32[4,1,128], index: 8, kind: output, shape index: {2}]
  %9 = xla_tuple %s6, %s7, %s8
  %s10 = sld [smem:[#allocation0]]
  $region73: #{residual_block_forward.6} parent=0
    _
  %s12 = ssub.s32 1, %s10
  %s13 = scalar_select 0, %s12, %s10
  loop: start=0, step=1, limit=6
  $region2: #{residual_block_forward.6} parent=0 // loop_pre_header
    _
  $region3: #{residual_block_forward.6} parent=0 // loop_header
    %s15 = sphi 0, %s19
    %p16 = scmp.ge.s32.totalorder %s15, 6
    %s25 = sphi 0, %s27
    %s28 = sphi 0, %s25
    %s29 = sphi 0, %s28
    %s45 = sphi 0, %s29
    %s49 = sphi 0, %s49
    %s51 = sphi 0, %s49
    %s52 = sphi 0, %s51
    %s66 = sphi 0, %s52
    %s70 = sphi 0, %s70
    %s72 = sphi 0, %s70
    %s73 = sphi 0, %s72
    %s87 = sphi 0, %s73
    %s93 = sphi 0, %s95
    %s96 = sphi 0, %s93
    %s97 = sphi 0, %s96
    %s113 = sphi 0, %s97
    %s117 = sphi 0, %s117
    %s119 = sphi 0, %s117
    %s120 = sphi 0, %s119
    %s134 = sphi 0, %s120
    %s138 = sphi 0, %s138
    %s140 = sphi 0, %s138
    %s141 = sphi 0, %s140
    %s155 = sphi 0, %s141
    %s161 = sphi 0, %s163
    %s164 = sphi 0, %s161
    %s165 = sphi 0, %s164
    %s181 = sphi 0, %s165
    %s187 = sphi 0, %s189
    %s190 = sphi 0, %s187
    %s191 = sphi 0, %s190
    %s207 = sphi 0, %s191
    %s213 = sphi 0, %s215
    %s216 = sphi 0, %s213
    %s217 = sphi 0, %s216
    %s233 = sphi 0, %s217
  $region4: #{residual_block_forward.6} parent=0 // loop_header_branch
    %18 = sbr.rel (%p16) target = $region8
  $region5: #{residual_block_forward.6} parent=0 // loop_body
    %s20 = ssub.s32 %s15, 1
    %s21 = ssub.s32 %s15, 2
    %s22 = sadd.s32 %s15, 1
    %s23 = ssub.s32 %s15, %s22
    %p24 = scmp.eq.s32.totalorder %s23, 0
    %s26 = sadd.s32 %s25, 1
    %s27 = scalar_select %p24, %s25, %s26
    %p30 = pneg %p24
    %p31 = scmp.eq.s32.totalorder %s15, 3
    %p32 = por %p30, %p31
    %p33 = scmp.ne.s32.totalorder %s25, %s28
    %p34 = scmp.eq.s32.totalorder %s15, 0
    %p35 = por %p33, %p34
    %p36 = scmp.ne.s32.totalorder %s25, %s28
    %p37 = scmp.eq.s32.totalorder %s20, 3
    %p38 = por %p36, %p37
    %p39 = scmp.ne.s32.totalorder %s28, %s29
    %p40 = scmp.eq.s32.totalorder %s20, 0
    %p41 = por %p39, %p40
    %p42 = scmp.ne.s32.totalorder %s28, %s29
    %p43 = scmp.eq.s32.totalorder %s21, 3
    %p44 = por %p42, %p43
    %p46 = scmp.ne.s32.totalorder %s29, %s45
    %p47 = scmp.eq.s32.totalorder %s21, 0
    %p48 = por %p46, %p47
    %s50 = sadd.s32 %s49, 1
    %p53 = scmp.eq.s32.totalorder %s15, 3
    %p54 = scmp.ne.s32.totalorder %s49, %s51
    %p55 = scmp.eq.s32.totalorder %s15, 0
    %p56 = por %p54, %p55
    %p57 = scmp.ne.s32.totalorder %s49, %s51
    %p58 = scmp.eq.s32.totalorder %s20, 3
    %p59 = por %p57, %p58
    %p60 = scmp.ne.s32.totalorder %s51, %s52
    %p61 = scmp.eq.s32.totalorder %s20, 0
    %p62 = por %p60, %p61
    %p63 = scmp.ne.s32.totalorder %s51, %s52
    %p64 = scmp.eq.s32.totalorder %s21, 3
    %p65 = por %p63, %p64
    %p67 = scmp.ne.s32.totalorder %s52, %s66
    %p68 = scmp.eq.s32.totalorder %s21, 0
    %p69 = por %p67, %p68
    %s71 = sadd.s32 %s70, 1
    %p74 = scmp.eq.s32.totalorder %s15, 3
    %p75 = scmp.ne.s32.totalorder %s70, %s72
    %p76 = scmp.eq.s32.totalorder %s15, 0
    %p77 = por %p75, %p76
    %p78 = scmp.ne.s32.totalorder %s70, %s72
    %p79 = scmp.eq.s32.totalorder %s20, 3
    %p80 = por %p78, %p79
    %p81 = scmp.ne.s32.totalorder %s72, %s73
    %p82 = scmp.eq.s32.totalorder %s20, 0
    %p83 = por %p81, %p82
    %p84 = scmp.ne.s32.totalorder %s72, %s73
    %p85 = scmp.eq.s32.totalorder %s21, 3
    %p86 = por %p84, %p85
    %p88 = scmp.ne.s32.totalorder %s73, %s87
    %p89 = scmp.eq.s32.totalorder %s21, 0
    %p90 = por %p88, %p89
    %s91 = ssub.s32 %s15, %s22
    %p92 = scmp.eq.s32.totalorder %s91, 0
    %s94 = sadd.s32 %s93, 1
    %s95 = scalar_select %p92, %s93, %s94
    %p98 = pneg %p92
    %p99 = scmp.eq.s32.totalorder %s15, 3
    %p100 = por %p98, %p99
    %p101 = scmp.ne.s32.totalorder %s93, %s96
    %p102 = scmp.eq.s32.totalorder %s15, 0
    %p103 = por %p101, %p102
    %p104 = scmp.ne.s32.totalorder %s93, %s96
    %p105 = scmp.eq.s32.totalorder %s20, 3
    %p106 = por %p104, %p105
    %p107 = scmp.ne.s32.totalorder %s96, %s97
    %p108 = scmp.eq.s32.totalorder %s20, 0
    %p109 = por %p107, %p108
    %p110 = scmp.ne.s32.totalorder %s96, %s97
    %p111 = scmp.eq.s32.totalorder %s21, 3
    %p112 = por %p110, %p111
    %p114 = scmp.ne.s32.totalorder %s97, %s113
    %p115 = scmp.eq.s32.totalorder %s21, 0
    %p116 = por %p114, %p115
    %s118 = sadd.s32 %s117, 1
    %p121 = scmp.eq.s32.totalorder %s15, 3
    %p122 = scmp.ne.s32.totalorder %s117, %s119
    %p123 = scmp.eq.s32.totalorder %s15, 0
    %p124 = por %p122, %p123
    %p125 = scmp.ne.s32.totalorder %s117, %s119
    %p126 = scmp.eq.s32.totalorder %s20, 3
    %p127 = por %p125, %p126
    %p128 = scmp.ne.s32.totalorder %s119, %s120
    %p129 = scmp.eq.s32.totalorder %s20, 0
    %p130 = por %p128, %p129
    %p131 = scmp.ne.s32.totalorder %s119, %s120
    %p132 = scmp.eq.s32.totalorder %s21, 3
    %p133 = por %p131, %p132
    %p135 = scmp.ne.s32.totalorder %s120, %s134
    %p136 = scmp.eq.s32.totalorder %s21, 0
    %p137 = por %p135, %p136
    %s139 = sadd.s32 %s138, 1
    %p142 = scmp.eq.s32.totalorder %s15, 3
    %p143 = scmp.ne.s32.totalorder %s138, %s140
    %p144 = scmp.eq.s32.totalorder %s15, 0
    %p145 = por %p143, %p144
    %p146 = scmp.ne.s32.totalorder %s138, %s140
    %p147 = scmp.eq.s32.totalorder %s20, 3
    %p148 = por %p146, %p147
    %p149 = scmp.ne.s32.totalorder %s140, %s141
    %p150 = scmp.eq.s32.totalorder %s20, 0
    %p151 = por %p149, %p150
    %p152 = scmp.ne.s32.totalorder %s140, %s141
    %p153 = scmp.eq.s32.totalorder %s21, 3
    %p154 = por %p152, %p153
    %p156 = scmp.ne.s32.totalorder %s141, %s155
    %p157 = scmp.eq.s32.totalorder %s21, 0
    %p158 = por %p156, %p157
    %s159 = ssub.s32 %s15, %s22
    %p160 = scmp.eq.s32.totalorder %s159, 0
    %s162 = sadd.s32 %s161, 1
    %s163 = scalar_select %p160, %s161, %s162
    %p166 = pneg %p160
    %p167 = scmp.eq.s32.totalorder %s15, 3
    %p168 = por %p166, %p167
    %p169 = scmp.ne.s32.totalorder %s161, %s164
    %p170 = scmp.eq.s32.totalorder %s15, 0
    %p171 = por %p169, %p170
    %p172 = scmp.ne.s32.totalorder %s161, %s164
    %p173 = scmp.eq.s32.totalorder %s20, 3
    %p174 = por %p172, %p173
    %p175 = scmp.ne.s32.totalorder %s164, %s165
    %p176 = scmp.eq.s32.totalorder %s20, 0
    %p177 = por %p175, %p176
    %p178 = scmp.ne.s32.totalorder %s164, %s165
    %p179 = scmp.eq.s32.totalorder %s21, 3
    %p180 = por %p178, %p179
    %p182 = scmp.ne.s32.totalorder %s165, %s181
    %p183 = scmp.eq.s32.totalorder %s21, 0
    %p184 = por %p182, %p183
    %s185 = ssub.s32 %s15, %s22
    %p186 = scmp.eq.s32.totalorder %s185, 0
    %s188 = sadd.s32 %s187, 1
    %s189 = scalar_select %p186, %s187, %s188
    %p192 = pneg %p186
    %p193 = scmp.eq.s32.totalorder %s15, 3
    %p194 = por %p192, %p193
    %p195 = scmp.ne.s32.totalorder %s187, %s190
    %p196 = scmp.eq.s32.totalorder %s15, 0
    %p197 = por %p195, %p196
    %p198 = scmp.ne.s32.totalorder %s187, %s190
    %p199 = scmp.eq.s32.totalorder %s20, 3
    %p200 = por %p198, %p199
    %p201 = scmp.ne.s32.totalorder %s190, %s191
    %p202 = scmp.eq.s32.totalorder %s20, 0
    %p203 = por %p201, %p202
    %p204 = scmp.ne.s32.totalorder %s190, %s191
    %p205 = scmp.eq.s32.totalorder %s21, 3
    %p206 = por %p204, %p205
    %p208 = scmp.ne.s32.totalorder %s191, %s207
    %p209 = scmp.eq.s32.totalorder %s21, 0
    %p210 = por %p208, %p209
    %s211 = ssub.s32 %s15, %s22
    %p212 = scmp.eq.s32.totalorder %s211, 0
    %s214 = sadd.s32 %s213, 1
    %s215 = scalar_select %p212, %s213, %s214
    %p218 = pneg %p212
    %p219 = scmp.eq.s32.totalorder %s15, 3
    %p220 = por %p218, %p219
    %p221 = scmp.ne.s32.totalorder %s213, %s216
    %p222 = scmp.eq.s32.totalorder %s15, 0
    %p223 = por %p221, %p222
    %p224 = scmp.ne.s32.totalorder %s213, %s216
    %p225 = scmp.eq.s32.totalorder %s20, 3
    %p226 = por %p224, %p225
    %p227 = scmp.ne.s32.totalorder %s216, %s217
    %p228 = scmp.eq.s32.totalorder %s20, 0
    %p229 = por %p227, %p228
    %p230 = scmp.ne.s32.totalorder %s216, %s217
    %p231 = scmp.eq.s32.totalorder %s21, 3
    %p232 = por %p230, %p231
    %p234 = scmp.ne.s32.totalorder %s217, %s233
    %p235 = scmp.eq.s32.totalorder %s21, 0
    %p236 = por %p234, %p235
    %p237 = scmp.le.s32.totalorder 1, %s15
    %p238 = scmp.lt.s32.totalorder %s15, 5
    %p239 = pnand %p237, %p238
    %p240 = pneg %p239
    // Predicated region
    $region9: #{residual_block_forward.6} parent=5 // pred_check
      _
    $region10: #{residual_block_forward.6} parent=5 // pred_check_branch
      %242 = sbr.rel (%p239) target = $region12
    $region11: #{residual_block_forward.6} parent=5 // pred_region
      %s243 = ssub.s32 %s15, 1
      // Predicated region
      $region13: #{residual_block_forward.6} parent=11 // pred_check
        %p244 = pneg %p62
      $region14: #{residual_block_forward.6} parent=11 // pred_check_branch
        %246 = sbr.rel (%p244) target = $region16
      $region15: #{residual_block_forward.6} parent=11 // pred_region
        _
      $region16: #{residual_block_forward.6} parent=11 // pred_fallthru
        _
      // Predicated region
      $region17: #{residual_block_forward.6} parent=11 // pred_check
        %p247 = pneg %p83
      $region18: #{residual_block_forward.6} parent=11 // pred_check_branch
        %249 = sbr.rel (%p247) target = $region20
      $region19: #{residual_block_forward.6} parent=11 // pred_region
        _
      $region20: #{residual_block_forward.6} parent=11 // pred_fallthru
        _
      // Predicated region
      $region21: #{residual_block_forward.6} parent=11 // pred_check
        %p250 = pneg %p130
      $region22: #{residual_block_forward.6} parent=11 // pred_check_branch
        %252 = sbr.rel (%p250) target = $region24
      $region23: #{residual_block_forward.6} parent=11 // pred_region
        _
      $region24: #{residual_block_forward.6} parent=11 // pred_fallthru
        _
      // Predicated region
      $region25: #{residual_block_forward.6} parent=11 // pred_check
        %p253 = pneg %p151
      $region26: #{residual_block_forward.6} parent=11 // pred_check_branch
        %255 = sbr.rel (%p253) target = $region28
      $region27: #{residual_block_forward.6} parent=11 // pred_region
        _
      $region28: #{residual_block_forward.6} parent=11 // pred_fallthru
        _
    $region12: #{residual_block_forward.6} parent=5 // pred_fallthru
      _
    %p256 = scmp.lt.s32.totalorder %s15, 4
    // Predicated region
    $region29: #{residual_block_forward.6} parent=5 // pred_check
      %p257 = pneg %p256
    $region30: #{residual_block_forward.6} parent=5 // pred_check_branch
      %259 = sbr.rel (%p257) target = $region32
    $region31: #{residual_block_forward.6} parent=5 // pred_region
      // Predicated region
      $region33: #{residual_block_forward.6} parent=31 // pred_check
        %p260 = pneg %p35
      $region34: #{residual_block_forward.6} parent=31 // pred_check_branch
        %262 = sbr.rel (%p260) target = $region36
      $region35: #{residual_block_forward.6} parent=31 // pred_region
        %s263 = smul.u32 16, %s15
        %p264 = scmp.lt.s32.totalorder %s263, 63
        %s265 = scalar_select %p264, %s263, 63
        %s266 = smul.addr %s265, 4
        %s267 = scalar_lea.vmem %s0, %s266
        %s268 = smul.u32 16, %s15
      $region36: #{residual_block_forward.6} parent=31 // pred_fallthru
        _
      // Predicated region
      $region37: #{residual_block_forward.6} parent=31 // pred_check
        %p269 = pneg %p103
      $region38: #{residual_block_forward.6} parent=31 // pred_check_branch
        %271 = sbr.rel (%p269) target = $region40
      $region39: #{residual_block_forward.6} parent=31 // pred_region
        %s272 = smul.u32 16, %s15
        %p273 = scmp.lt.s32.totalorder %s272, 63
        %s274 = scalar_select %p273, %s272, 63
        %s275 = smul.addr %s274, 4
        %s276 = scalar_lea.vmem %s3, %s275
        %s277 = smul.u32 16, %s15
      $region40: #{residual_block_forward.6} parent=31 // pred_fallthru
        _
    $region32: #{residual_block_forward.6} parent=5 // pred_fallthru
      _
    %p278 = scmp.le.s32.totalorder 1, %s15
    %p279 = scmp.lt.s32.totalorder %s15, 5
    %p280 = pnand %p278, %p279
    %p281 = pneg %p280
    // Predicated region
    $region41: #{residual_block_forward.6} parent=5 // pred_check
      _
    $region42: #{residual_block_forward.6} parent=5 // pred_check_branch
      %283 = sbr.rel (%p280) target = $region44
    $region43: #{residual_block_forward.6} parent=5 // pred_region
      %s284 = ssub.s32 %s15, 1
      %s285 = smul.u32 16, %s20
      %p286 = scmp.lt.s32.totalorder %s285, 63
      %s287 = scalar_select %p286, %s285, 63
      %s288 = smul.addr %s287, 4
      %s289 = scalar_lea.vmem %s0, %s288
      %p290 = pneg %p41
      %p291 = pneg %p38
      %p292 = pneg %p62
      %p293 = pneg %p59
      %p294 = pneg %p83
      %p295 = pneg %p80
      %s296 = smul.u32 16, %s20
      %p297 = scmp.lt.s32.totalorder %s296, 63
      %s298 = scalar_select %p297, %s296, 63
      %s299 = smul.addr %s298, 4
      %s300 = scalar_lea.vmem %s3, %s299
      %p301 = pneg %p109
      %p302 = pneg %p106
      %p303 = pneg %p130
      %p304 = pneg %p127
      %p305 = pneg %p151
      %p306 = pneg %p148
      %p307 = pneg %p177
      %p308 = pneg %p174
      %s309 = smul.u32 16, %s20
      %p310 = scmp.lt.s32.totalorder %s309, 63
      %s311 = scalar_select %p310, %s309, 63
      %s312 = smul.addr %s311, 8
      %s313 = scalar_lea.vmem %s6, %s312
      %p314 = pneg %p203
      %p315 = pneg %p200
      %p316 = scmp.lt.s32.totalorder %s20, 3
      %s317 = scalar_select %p316, %s20, 3
      %s318 = scalar_lea.vmem %s7, %s317
      %p319 = pneg %p229
      %p320 = pneg %p226
      %p321 = scmp.lt.s32.totalorder %s20, 3
      %s322 = scalar_select %p321, %s20, 3
      %s323 = scalar_lea.vmem %s8, %s322
      %s324 = smul.u32 16, %s20
      %p325 = scmp.lt.s32.totalorder %s324, 63
      %s326 = scalar_select %p325, %s324, 63
      %s327 = smul.addr %s326, 4
      %s328 = scalar_lea.vmem %s0, %s327
      %s329 = smul.u32 16, %s20
      %s330 = smul.u32 16, %s20
      %p331 = scmp.lt.s32.totalorder %s330, 63
      %s332 = scalar_select %p331, %s330, 63
      %s333 = smul.addr %s332, 4
      %s334 = scalar_lea.vmem %s3, %s333
      %s335 = smul.u32 16, %s20
      %s336 = smul.u32 16, %s20
      %p337 = scmp.lt.s32.totalorder %s336, 63
      %s338 = scalar_select %p337, %s336, 63
      %s339 = smul.addr %s338, 8
      %s340 = scalar_lea.vmem %s6, %s339
      %s341 = smul.u32 16, %s20
      %p342 = scmp.lt.s32.totalorder %s20, 3
      %s343 = scalar_select %p342, %s20, 3
      %s344 = scalar_lea.vmem %s7, %s343
      %p345 = scmp.lt.s32.totalorder %s20, 3
      %s346 = scalar_select %p345, %s20, 3
      %s347 = scalar_lea.vmem %s8, %s346
      %v349 = vld [vmem:[%s328] sm:$0xf]
      %v350 = vld [vmem:[%s328 + $0x4] sm:$0xf]
      %v351 = vld [vmem:[%s328 + $0x8] sm:$0xf]
      %v352 = vld [vmem:[%s328 + $0xc] sm:$0xf]
      %v353 = vld [vmem:[%s328 + $0x10] sm:$0xf]
      %v354 = vld [vmem:[%s328 + $0x14] sm:$0xf]
      %v355 = vld [vmem:[%s328 + $0x18] sm:$0xf]
      %v356 = vld [vmem:[%s328 + $0x1c] sm:$0xf]
      %v357 = vld [vmem:[%s328 + $0x20] sm:$0xf]
      %v358 = vld [vmem:[%s328 + $0x24] sm:$0xf]
      %v359 = vld [vmem:[%s328 + $0x28] sm:$0xf]
      %v360 = vld [vmem:[%s328 + $0x2c] sm:$0xf]
      %v361 = vld [vmem:[%s328 + $0x30] sm:$0xf]
      %v362 = vld [vmem:[%s328 + $0x34] sm:$0xf]
      %v363 = vld [vmem:[%s328 + $0x38] sm:$0xf]
      %v364 = vld [vmem:[%s328 + $0x3c] sm:$0xf]
      %v365 = vld [vmem:[%s1] sm:$0xf]
      %v366 = vld [vmem:[%s1 + $0x4] sm:$0xf]
      %v367 = vld [vmem:[%s1 + $0x8] sm:$0xf]
      %v368 = vld [vmem:[%s1 + $0xc] sm:$0xf]
      %v369 = vld [vmem:[%s1 + $0x10] sm:$0xf]
      %v370 = vld [vmem:[%s1 + $0x14] sm:$0xf]
      %v371 = vld [vmem:[%s1 + $0x18] sm:$0xf]
      %v372 = vld [vmem:[%s1 + $0x1c] sm:$0xf]
      %v373 = vld [vmem:[%s1 + $0x20] sm:$0xf]
      %v374 = vld [vmem:[%s1 + $0x24] sm:$0xf]
      %v375 = vld [vmem:[%s1 + $0x28] sm:$0xf]
      %v376 = vld [vmem:[%s1 + $0x2c] sm:$0xf]
      %v377 = vld [vmem:[%s1 + $0x30] sm:$0xf]
      %v378 = vld [vmem:[%s1 + $0x34] sm:$0xf]
      %v379 = vld [vmem:[%s1 + $0x38] sm:$0xf]
      %v380 = vld [vmem:[%s1 + $0x3c] sm:$0xf]
      %v381 = vld [vmem:[%s2] sm:$0x1]
      %v383 = vlaneseq
      %v384 = vshrl.u32 %v383, 7
      %v385 = vsub.s32 0, %v384
      %v386 = vrot.slane %v381, %v385
      %v404 = vunpack.c.l.b16 %v349
      %v405 = vunpack.c.l.b16 %v350
      %v406 = vunpack.c.l.b16 %v351
      %v407 = vunpack.c.l.b16 %v352
      %v408 = vunpack.c.l.b16 %v353
      %v409 = vunpack.c.l.b16 %v354
      %v410 = vunpack.c.l.b16 %v355
      %v411 = vunpack.c.l.b16 %v356
      %v412 = vunpack.c.l.b16 %v357
      %v413 = vunpack.c.l.b16 %v358
      %v414 = vunpack.c.l.b16 %v359
      %v415 = vunpack.c.l.b16 %v360
      %v416 = vunpack.c.l.b16 %v361
      %v417 = vunpack.c.l.b16 %v362
      %v418 = vunpack.c.l.b16 %v363
      %v419 = vunpack.c.l.b16 %v364
      %v420 = vpack.c.b16 %v405, %v404
      %v421 = vpack.c.b16 %v407, %v406
      %v422 = vpack.c.b16 %v409, %v408
      %v423 = vpack.c.b16 %v411, %v410
      %v424 = vpack.c.b16 %v413, %v412
      %v425 = vpack.c.b16 %v415, %v414
      %v426 = vpack.c.b16 %v417, %v416
      %v427 = vpack.c.b16 %v419, %v418
      %v452 = vunpack.c.l.b16 %v365
      %v453 = vunpack.c.l.b16 %v366
      %v454 = vunpack.c.l.b16 %v367
      %v455 = vunpack.c.l.b16 %v368
      %v456 = vunpack.c.l.b16 %v369
      %v457 = vunpack.c.l.b16 %v370
      %v458 = vunpack.c.l.b16 %v371
      %v459 = vunpack.c.l.b16 %v372
      %v460 = vunpack.c.l.b16 %v373
      %v461 = vunpack.c.l.b16 %v374
      %v462 = vunpack.c.l.b16 %v375
      %v463 = vunpack.c.l.b16 %v376
      %v464 = vunpack.c.l.b16 %v377
      %v465 = vunpack.c.l.b16 %v378
      %v466 = vunpack.c.l.b16 %v379
      %v467 = vunpack.c.l.b16 %v380
      %v468 = vpack.c.b16 %v453, %v452
      %v469 = vpack.c.b16 %v455, %v454
      %v470 = vpack.c.b16 %v457, %v456
      %v471 = vpack.c.b16 %v459, %v458
      %v472 = vpack.c.b16 %v461, %v460
      %v473 = vpack.c.b16 %v463, %v462
      %v474 = vpack.c.b16 %v465, %v464
      %v475 = vpack.c.b16 %v467, %v466
      %484 = vmatprep.subr.bf16.mxu0 0
      %485 = vmatpush1.bf16.msra.mxu0 %v475
      %486 = vmatprep.subr.bf16.mxu0 0
      %487 = vmatpush1.bf16.msra.mxu0 %v474
      %488 = vmatprep.subr.bf16.mxu0 0
      %489 = vmatpush1.bf16.msra.mxu0 %v473
      %490 = vmatprep.subr.bf16.mxu0 0
      %491 = vmatpush1.bf16.msra.mxu0 %v472
      %492 = vmatprep.subr.bf16.mxu0 0
      %493 = vmatpush1.bf16.msra.mxu0 %v471
      %494 = vmatprep.subr.bf16.mxu0 0
      %495 = vmatpush1.bf16.msra.mxu0 %v470
      %496 = vmatprep.subr.bf16.mxu0 0
      %497 = vmatpush1.bf16.msra.mxu0 %v469
      %498 = vmatprep.subr.bf16.mxu0 0
      %499 = vmatpush1.bf16.msra.mxu0 %v468
      %500 = vmatprep.subr.bf16.mxu0 0
      %501 = vmatpush2.bf16.msra.mxu0 0
      %502 = vmatprep.subr.bf16.mxu0 0
      %503 = vmatpush2.bf16.msra.mxu0 0
      %504 = vmatprep.subr.bf16.mxu0 0
      %505 = vmatpush2.bf16.msra.mxu0 0
      %506 = vmatprep.subr.bf16.mxu0 0
      %507 = vmatpush2.bf16.msra.mxu0 0
      %508 = vmatprep.subr.bf16.mxu0 0
      %509 = vmatpush2.bf16.msra.mxu0 0
      %510 = vmatprep.subr.bf16.mxu0 0
      %511 = vmatpush2.bf16.msra.mxu0 0
      %512 = vmatprep.subr.bf16.mxu0 0
      %513 = vmatpush2.bf16.msra.mxu0 0
      %514 = vmatprep.subr.bf16.mxu0 0
      %515 = vmatpush2.bf16.msra.mxu0 0
      %516 = vmatprep.mubr.bf16.mxu0 0
      %517 = vmatmul.mubr.bf16.gmra.mxu0 %v420
      %v518 = vpop.f32.mrf.mxu0
      %v519 = vadd.f32 %v386, %v518
      %v520 = vpop.f32.mrf.mxu0
      %v521 = vpop.f32.mrf.mxu0
      %v522 = vadd.f32 %v386, %v521
      %v523 = vpop.f32.mrf.mxu0
      %524 = vmatprep.mubr.bf16.mxu0 0
      %525 = vmatmul.mubr.bf16.gmra.mxu0 %v421
      %v526 = vpop.f32.mrf.mxu0
      %v527 = vadd.f32 %v386, %v526
      %v528 = vpop.f32.mrf.mxu0
      %v529 = vpop.f32.mrf.mxu0
      %v530 = vadd.f32 %v386, %v529
      %v531 = vpop.f32.mrf.mxu0
      %532 = vmatprep.mubr.bf16.mxu0 0
      %533 = vmatmul.mubr.bf16.gmra.mxu0 %v422
      %v534 = vpop.f32.mrf.mxu0
      %v535 = vadd.f32 %v386, %v534
      %v536 = vpop.f32.mrf.mxu0
      %v537 = vpop.f32.mrf.mxu0
      %v538 = vadd.f32 %v386, %v537
      %v539 = vpop.f32.mrf.mxu0
      %540 = vmatprep.mubr.bf16.mxu0 0
      %541 = vmatmul.mubr.bf16.gmra.mxu0 %v423
      %v542 = vpop.f32.mrf.mxu0
      %v543 = vadd.f32 %v386, %v542
      %v544 = vpop.f32.mrf.mxu0
      %v545 = vpop.f32.mrf.mxu0
      %v546 = vadd.f32 %v386, %v545
      %v547 = vpop.f32.mrf.mxu0
      %548 = vmatprep.mubr.bf16.mxu0 0
      %549 = vmatmul.mubr.bf16.gmra.mxu0 %v424
      %v550 = vpop.f32.mrf.mxu0
      %v551 = vadd.f32 %v386, %v550
      %v552 = vpop.f32.mrf.mxu0
      %v553 = vpop.f32.mrf.mxu0
      %v554 = vadd.f32 %v386, %v553
      %v555 = vpop.f32.mrf.mxu0
      %556 = vmatprep.mubr.bf16.mxu0 0
      %557 = vmatmul.mubr.bf16.gmra.mxu0 %v425
      %v558 = vpop.f32.mrf.mxu0
      %v559 = vadd.f32 %v386, %v558
      %v560 = vpop.f32.mrf.mxu0
      %v561 = vpop.f32.mrf.mxu0
      %v562 = vadd.f32 %v386, %v561
      %v563 = vpop.f32.mrf.mxu0
      %564 = vmatprep.mubr.bf16.mxu0 0
      %565 = vmatmul.mubr.bf16.gmra.mxu0 %v426
      %v566 = vpop.f32.mrf.mxu0
      %v567 = vadd.f32 %v386, %v566
      %v568 = vpop.f32.mrf.mxu0
      %v569 = vpop.f32.mrf.mxu0
      %v570 = vadd.f32 %v386, %v569
      %v571 = vpop.f32.mrf.mxu0
      %572 = vmatprep.mubr.bf16.mxu0 0
      %573 = vmatmul.mubr.bf16.gmra.mxu0 %v427
      %v574 = vpop.f32.mrf.mxu0
      %v575 = vadd.f32 %v386, %v574
      %v576 = vpop.f32.mrf.mxu0
      %v577 = vpop.f32.mrf.mxu0
      %v578 = vadd.f32 %v386, %v577
      %v579 = vpop.f32.mrf.mxu0
      %580 = vdwg.mxu0
      %v581 = vld [vmem:[%s334] sm:$0xf]
      %v582 = vld [vmem:[%s334 + $0x4] sm:$0xf]
      %v583 = vld [vmem:[%s334 + $0x8] sm:$0xf]
      %v584 = vld [vmem:[%s334 + $0xc] sm:$0xf]
      %v585 = vld [vmem:[%s334 + $0x10] sm:$0xf]
      %v586 = vld [vmem:[%s334 + $0x14] sm:$0xf]
      %v587 = vld [vmem:[%s334 + $0x18] sm:$0xf]
      %v588 = vld [vmem:[%s334 + $0x1c] sm:$0xf]
      %v589 = vld [vmem:[%s334 + $0x20] sm:$0xf]
      %v590 = vld [vmem:[%s334 + $0x24] sm:$0xf]
      %v591 = vld [vmem:[%s334 + $0x28] sm:$0xf]
      %v592 = vld [vmem:[%s334 + $0x2c] sm:$0xf]
      %v593 = vld [vmem:[%s334 + $0x30] sm:$0xf]
      %v594 = vld [vmem:[%s334 + $0x34] sm:$0xf]
      %v595 = vld [vmem:[%s334 + $0x38] sm:$0xf]
      %v596 = vld [vmem:[%s334 + $0x3c] sm:$0xf]
      %v597 = vld [vmem:[%s4] sm:$0xf]
      %v598 = vld [vmem:[%s4 + $0x4] sm:$0xf]
      %v599 = vld [vmem:[%s4 + $0x8] sm:$0xf]
      %v600 = vld [vmem:[%s4 + $0xc] sm:$0xf]
      %v601 = vld [vmem:[%s4 + $0x10] sm:$0xf]
      %v602 = vld [vmem:[%s4 + $0x14] sm:$0xf]
      %v603 = vld [vmem:[%s4 + $0x18] sm:$0xf]
      %v604 = vld [vmem:[%s4 + $0x1c] sm:$0xf]
      %v605 = vld [vmem:[%s4 + $0x20] sm:$0xf]
      %v606 = vld [vmem:[%s4 + $0x24] sm:$0xf]
      %v607 = vld [vmem:[%s4 + $0x28] sm:$0xf]
      %v608 = vld [vmem:[%s4 + $0x2c] sm:$0xf]
      %v609 = vld [vmem:[%s4 + $0x30] sm:$0xf]
      %v610 = vld [vmem:[%s4 + $0x34] sm:$0xf]
      %v611 = vld [vmem:[%s4 + $0x38] sm:$0xf]
      %v612 = vld [vmem:[%s4 + $0x3c] sm:$0xf]
      %v613 = vld [vmem:[%s5] sm:$0x1]
      %v615 = vlaneseq
      %v616 = vshrl.u32 %v615, 7
      %v617 = vsub.s32 0, %v616
      %v618 = vrot.slane %v613, %v617
      %v636 = vunpack.c.l.b16 %v581
      %v637 = vunpack.c.l.b16 %v582
      %v638 = vunpack.c.l.b16 %v583
      %v639 = vunpack.c.l.b16 %v584
      %v640 = vunpack.c.l.b16 %v585
      %v641 = vunpack.c.l.b16 %v586
      %v642 = vunpack.c.l.b16 %v587
      %v643 = vunpack.c.l.b16 %v588
      %v644 = vunpack.c.l.b16 %v589
      %v645 = vunpack.c.l.b16 %v590
      %v646 = vunpack.c.l.b16 %v591
      %v647 = vunpack.c.l.b16 %v592
      %v648 = vunpack.c.l.b16 %v593
      %v649 = vunpack.c.l.b16 %v594
      %v650 = vunpack.c.l.b16 %v595
      %v651 = vunpack.c.l.b16 %v596
      %v652 = vpack.c.b16 %v637, %v636
      %v653 = vpack.c.b16 %v639, %v638
      %v654 = vpack.c.b16 %v641, %v640
      %v655 = vpack.c.b16 %v643, %v642
      %v656 = vpack.c.b16 %v645, %v644
      %v657 = vpack.c.b16 %v647, %v646
      %v658 = vpack.c.b16 %v649, %v648
      %v659 = vpack.c.b16 %v651, %v650
      %v684 = vunpack.c.l.b16 %v597
      %v685 = vunpack.c.l.b16 %v598
      %v686 = vunpack.c.l.b16 %v599
      %v687 = vunpack.c.l.b16 %v600
      %v688 = vunpack.c.l.b16 %v601
      %v689 = vunpack.c.l.b16 %v602
      %v690 = vunpack.c.l.b16 %v603
      %v691 = vunpack.c.l.b16 %v604
      %v692 = vunpack.c.l.b16 %v605
      %v693 = vunpack.c.l.b16 %v606
      %v694 = vunpack.c.l.b16 %v607
      %v695 = vunpack.c.l.b16 %v608
      %v696 = vunpack.c.l.b16 %v609
      %v697 = vunpack.c.l.b16 %v610
      %v698 = vunpack.c.l.b16 %v611
      %v699 = vunpack.c.l.b16 %v612
      %v700 = vpack.c.b16 %v685, %v684
      %v701 = vpack.c.b16 %v687, %v686
      %v702 = vpack.c.b16 %v689, %v688
      %v703 = vpack.c.b16 %v691, %v690
      %v704 = vpack.c.b16 %v693, %v692
      %v705 = vpack.c.b16 %v695, %v694
      %v706 = vpack.c.b16 %v697, %v696
      %v707 = vpack.c.b16 %v699, %v698
      %716 = vmatprep.subr.bf16.mxu0 0
      %717 = vmatpush1.bf16.msra.mxu0 %v707
      %718 = vmatprep.subr.bf16.mxu0 0
      %719 = vmatpush1.bf16.msra.mxu0 %v706
      %720 = vmatprep.subr.bf16.mxu0 0
      %721 = vmatpush1.bf16.msra.mxu0 %v705
      %722 = vmatprep.subr.bf16.mxu0 0
      %723 = vmatpush1.bf16.msra.mxu0 %v704
      %724 = vmatprep.subr.bf16.mxu0 0
      %725 = vmatpush1.bf16.msra.mxu0 %v703
      %726 = vmatprep.subr.bf16.mxu0 0
      %727 = vmatpush1.bf16.msra.mxu0 %v702
      %728 = vmatprep.subr.bf16.mxu0 0
      %729 = vmatpush1.bf16.msra.mxu0 %v701
      %730 = vmatprep.subr.bf16.mxu0 0
      %731 = vmatpush1.bf16.msra.mxu0 %v700
      %732 = vmatprep.subr.bf16.mxu0 0
      %733 = vmatpush2.bf16.msra.mxu0 0
      %734 = vmatprep.subr.bf16.mxu0 0
      %735 = vmatpush2.bf16.msra.mxu0 0
      %736 = vmatprep.subr.bf16.mxu0 0
      %737 = vmatpush2.bf16.msra.mxu0 0
      %738 = vmatprep.subr.bf16.mxu0 0
      %739 = vmatpush2.bf16.msra.mxu0 0
      %740 = vmatprep.subr.bf16.mxu0 0
      %741 = vmatpush2.bf16.msra.mxu0 0
      %742 = vmatprep.subr.bf16.mxu0 0
      %743 = vmatpush2.bf16.msra.mxu0 0
      %744 = vmatprep.subr.bf16.mxu0 0
      %745 = vmatpush2.bf16.msra.mxu0 0
      %746 = vmatprep.subr.bf16.mxu0 0
      %747 = vmatpush2.bf16.msra.mxu0 0
      %748 = vmatprep.mubr.bf16.mxu0 0
      %749 = vmatmul.mubr.bf16.gmra.mxu0 %v652
      %v750 = vpop.f32.mrf.mxu0
      %v751 = vadd.f32 %v618, %v750
      %v752 = vpop.f32.mrf.mxu0
      %v753 = vpop.f32.mrf.mxu0
      %v754 = vadd.f32 %v618, %v753
      %v755 = vpop.f32.mrf.mxu0
      %756 = vmatprep.mubr.bf16.mxu0 0
      %757 = vmatmul.mubr.bf16.gmra.mxu0 %v653
      %v758 = vpop.f32.mrf.mxu0
      %v759 = vadd.f32 %v618, %v758
      %v760 = vpop.f32.mrf.mxu0
      %v761 = vpop.f32.mrf.mxu0
      %v762 = vadd.f32 %v618, %v761
      %v763 = vpop.f32.mrf.mxu0
      %764 = vmatprep.mubr.bf16.mxu0 0
      %765 = vmatmul.mubr.bf16.gmra.mxu0 %v654
      %v766 = vpop.f32.mrf.mxu0
      %v767 = vadd.f32 %v618, %v766
      %v768 = vpop.f32.mrf.mxu0
      %v769 = vpop.f32.mrf.mxu0
      %v770 = vadd.f32 %v618, %v769
      %v771 = vpop.f32.mrf.mxu0
      %772 = vmatprep.mubr.bf16.mxu0 0
      %773 = vmatmul.mubr.bf16.gmra.mxu0 %v655
      %v774 = vpop.f32.mrf.mxu0
      %v775 = vadd.f32 %v618, %v774
      %v776 = vpop.f32.mrf.mxu0
      %v777 = vpop.f32.mrf.mxu0
      %v778 = vadd.f32 %v618, %v777
      %v779 = vpop.f32.mrf.mxu0
      %780 = vmatprep.mubr.bf16.mxu0 0
      %781 = vmatmul.mubr.bf16.gmra.mxu0 %v656
      %v782 = vpop.f32.mrf.mxu0
      %v783 = vadd.f32 %v618, %v782
      %v784 = vpop.f32.mrf.mxu0
      %v785 = vpop.f32.mrf.mxu0
      %v786 = vadd.f32 %v618, %v785
      %v787 = vpop.f32.mrf.mxu0
      %788 = vmatprep.mubr.bf16.mxu0 0
      %789 = vmatmul.mubr.bf16.gmra.mxu0 %v657
      %v790 = vpop.f32.mrf.mxu0
      %v791 = vadd.f32 %v618, %v790
      %v792 = vpop.f32.mrf.mxu0
      %v793 = vpop.f32.mrf.mxu0
      %v794 = vadd.f32 %v618, %v793
      %v795 = vpop.f32.mrf.mxu0
      %796 = vmatprep.mubr.bf16.mxu0 0
      %797 = vmatmul.mubr.bf16.gmra.mxu0 %v658
      %v798 = vpop.f32.mrf.mxu0
      %v799 = vadd.f32 %v618, %v798
      %v800 = vpop.f32.mrf.mxu0
      %v801 = vpop.f32.mrf.mxu0
      %v802 = vadd.f32 %v618, %v801
      %v803 = vpop.f32.mrf.mxu0
      %804 = vmatprep.mubr.bf16.mxu0 0
      %805 = vmatmul.mubr.bf16.gmra.mxu0 %v659
      %v806 = vpop.f32.mrf.mxu0
      %v807 = vadd.f32 %v618, %v806
      %v808 = vpop.f32.mrf.mxu0
      %v809 = vpop.f32.mrf.mxu0
      %v810 = vadd.f32 %v618, %v809
      %v811 = vpop.f32.mrf.mxu0
      %812 = vdwg.mxu0
      %v813 = vadd.f32 %v519, %v751
      %v814 = vadd.f32 %v522, %v754
      %v815 = vadd.f32 %v527, %v759
      %v816 = vadd.f32 %v530, %v762
      %v817 = vadd.f32 %v535, %v767
      %v818 = vadd.f32 %v538, %v770
      %v819 = vadd.f32 %v543, %v775
      %v820 = vadd.f32 %v546, %v778
      %v821 = vadd.f32 %v551, %v783
      %v822 = vadd.f32 %v554, %v786
      %v823 = vadd.f32 %v559, %v791
      %v824 = vadd.f32 %v562, %v794
      %v825 = vadd.f32 %v567, %v799
      %v826 = vadd.f32 %v570, %v802
      %v827 = vadd.f32 %v575, %v807
      %v828 = vadd.f32 %v578, %v810
      %vm829 = vcmp.gt.f32.partialorder %v813, 0.0
      %vm830 = vcmp.gt.f32.partialorder %v814, 0.0
      %vm831 = vcmp.gt.f32.partialorder %v815, 0.0
      %vm832 = vcmp.gt.f32.partialorder %v816, 0.0
      %vm833 = vcmp.gt.f32.partialorder %v817, 0.0
      %vm834 = vcmp.gt.f32.partialorder %v818, 0.0
      %vm835 = vcmp.gt.f32.partialorder %v819, 0.0
      %vm836 = vcmp.gt.f32.partialorder %v820, 0.0
      %vm837 = vcmp.gt.f32.partialorder %v821, 0.0
      %vm838 = vcmp.gt.f32.partialorder %v822, 0.0
      %vm839 = vcmp.gt.f32.partialorder %v823, 0.0
      %vm840 = vcmp.gt.f32.partialorder %v824, 0.0
      %vm841 = vcmp.gt.f32.partialorder %v825, 0.0
      %vm842 = vcmp.gt.f32.partialorder %v826, 0.0
      %vm843 = vcmp.gt.f32.partialorder %v827, 0.0
      %vm844 = vcmp.gt.f32.partialorder %v828, 0.0
      %v845 = vmul.f32 %v813, 0.2
      %v846 = vmul.f32 %v814, 0.2
      %v847 = vmul.f32 %v815, 0.2
      %v848 = vmul.f32 %v816, 0.2
      %v849 = vmul.f32 %v817, 0.2
      %v850 = vmul.f32 %v818, 0.2
      %v851 = vmul.f32 %v819, 0.2
      %v852 = vmul.f32 %v820, 0.2
      %v853 = vmul.f32 %v821, 0.2
      %v854 = vmul.f32 %v822, 0.2
      %v855 = vmul.f32 %v823, 0.2
      %v856 = vmul.f32 %v824, 0.2
      %v857 = vmul.f32 %v825, 0.2
      %v858 = vmul.f32 %v826, 0.2
      %v859 = vmul.f32 %v827, 0.2
      %v860 = vmul.f32 %v828, 0.2
      %v861 = vsel %vm829, %v813, %v845
      %v862 = vsel %vm830, %v814, %v846
      %v863 = vsel %vm831, %v815, %v847
      %v864 = vsel %vm832, %v816, %v848
      %v865 = vsel %vm833, %v817, %v849
      %v866 = vsel %vm834, %v818, %v850
      %v867 = vsel %vm835, %v819, %v851
      %v868 = vsel %vm836, %v820, %v852
      %v869 = vsel %vm837, %v821, %v853
      %v870 = vsel %vm838, %v822, %v854
      %v871 = vsel %vm839, %v823, %v855
      %v872 = vsel %vm840, %v824, %v856
      %v873 = vsel %vm841, %v825, %v857
      %v874 = vsel %vm842, %v826, %v858
      %v875 = vsel %vm843, %v827, %v859
      %v876 = vsel %vm844, %v828, %v860
      %877 = vst [vmem:[%s340] sm:$0xff] %v861
      %878 = vst [vmem:[%s340 + $0x8] sm:$0xff] %v862
      %879 = vst [vmem:[%s340 + $0x10] sm:$0xff] %v863
      %880 = vst [vmem:[%s340 + $0x18] sm:$0xff] %v864
      %881 = vst [vmem:[%s340 + $0x20] sm:$0xff] %v865
      %882 = vst [vmem:[%s340 + $0x28] sm:$0xff] %v866
      %883 = vst [vmem:[%s340 + $0x30] sm:$0xff] %v867
      %884 = vst [vmem:[%s340 + $0x38] sm:$0xff] %v868
      %885 = vst [vmem:[%s340 + $0x40] sm:$0xff] %v869
      %886 = vst [vmem:[%s340 + $0x48] sm:$0xff] %v870
      %887 = vst [vmem:[%s340 + $0x50] sm:$0xff] %v871
      %888 = vst [vmem:[%s340 + $0x58] sm:$0xff] %v872
      %889 = vst [vmem:[%s340 + $0x60] sm:$0xff] %v873
      %890 = vst [vmem:[%s340 + $0x68] sm:$0xff] %v874
      %891 = vst [vmem:[%s340 + $0x70] sm:$0xff] %v875
      %892 = vst [vmem:[%s340 + $0x78] sm:$0xff] %v876
      %s893 = smul.u32 %s20, 128
      %v894 = vlaneseq
      %v895 = vshrl.u32 %v894, 7
      %v896 = vadd.s32 %v895, 8
      %v897 = vadd.s32 %v895, 16
      %v898 = vadd.s32 %v895, 24
      %v899 = vadd.s32 %v895, 32
      %v900 = vadd.s32 %v895, 40
      %v901 = vadd.s32 %v895, 48
      %v902 = vadd.s32 %v895, 56
      %v903 = vadd.s32 %v895, 64
      %v904 = vadd.s32 %v895, 72
      %v905 = vadd.s32 %v895, 80
      %v906 = vadd.s32 %v895, 88
      %v907 = vadd.s32 %v895, 96
      %v908 = vadd.s32 %v895, 104
      %v909 = vadd.s32 %v895, 112
      %v910 = vadd.s32 %v895, 120
      %v911 = vstv %s893
      %v912 = vadd.s32 %v911, %v895
      %v913 = vadd.s32 %v911, %v896
      %v914 = vadd.s32 %v911, %v897
      %v915 = vadd.s32 %v911, %v898
      %v916 = vadd.s32 %v911, %v899
      %v917 = vadd.s32 %v911, %v900
      %v918 = vadd.s32 %v911, %v901
      %v919 = vadd.s32 %v911, %v902
      %v920 = vadd.s32 %v911, %v903
      %v921 = vadd.s32 %v911, %v904
      %v922 = vadd.s32 %v911, %v905
      %v923 = vadd.s32 %v911, %v906
      %v924 = vadd.s32 %v911, %v907
      %v925 = vadd.s32 %v911, %v908
      %v926 = vadd.s32 %v911, %v909
      %v927 = vadd.s32 %v911, %v910
      %vm928 = vcmp.lt.s32.totalorder %v912, 512
      %vm929 = vcmp.lt.s32.totalorder %v913, 512
      %vm930 = vcmp.lt.s32.totalorder %v914, 512
      %vm931 = vcmp.lt.s32.totalorder %v915, 512
      %vm932 = vcmp.lt.s32.totalorder %v916, 512
      %vm933 = vcmp.lt.s32.totalorder %v917, 512
      %vm934 = vcmp.lt.s32.totalorder %v918, 512
      %vm935 = vcmp.lt.s32.totalorder %v919, 512
      %vm936 = vcmp.lt.s32.totalorder %v920, 512
      %vm937 = vcmp.lt.s32.totalorder %v921, 512
      %vm938 = vcmp.lt.s32.totalorder %v922, 512
      %vm939 = vcmp.lt.s32.totalorder %v923, 512
      %vm940 = vcmp.lt.s32.totalorder %v924, 512
      %vm941 = vcmp.lt.s32.totalorder %v925, 512
      %vm942 = vcmp.lt.s32.totalorder %v926, 512
      %vm943 = vcmp.lt.s32.totalorder %v927, 512
      %v944 = vsel %vm928, 1, 0
      %v945 = vsel %vm929, 1, 0
      %v946 = vsel %vm930, 1, 0
      %v947 = vsel %vm931, 1, 0
      %v948 = vsel %vm932, 1, 0
      %v949 = vsel %vm933, 1, 0
      %v950 = vsel %vm934, 1, 0
      %v951 = vsel %vm935, 1, 0
      %v952 = vsel %vm936, 1, 0
      %v953 = vsel %vm937, 1, 0
      %v954 = vsel %vm938, 1, 0
      %v955 = vsel %vm939, 1, 0
      %v956 = vsel %vm940, 1, 0
      %v957 = vsel %vm941, 1, 0
      %v958 = vsel %vm942, 1, 0
      %v959 = vsel %vm943, 1, 0
      %vm960 = vcmp.eq.s32.totalorder %v944, 1
      %vm961 = vcmp.eq.s32.totalorder %v945, 1
      %vm962 = vcmp.eq.s32.totalorder %v946, 1
      %vm963 = vcmp.eq.s32.totalorder %v947, 1
      %vm964 = vcmp.eq.s32.totalorder %v948, 1
      %vm965 = vcmp.eq.s32.totalorder %v949, 1
      %vm966 = vcmp.eq.s32.totalorder %v950, 1
      %vm967 = vcmp.eq.s32.totalorder %v951, 1
      %vm968 = vcmp.eq.s32.totalorder %v952, 1
      %vm969 = vcmp.eq.s32.totalorder %v953, 1
      %vm970 = vcmp.eq.s32.totalorder %v954, 1
      %vm971 = vcmp.eq.s32.totalorder %v955, 1
      %vm972 = vcmp.eq.s32.totalorder %v956, 1
      %vm973 = vcmp.eq.s32.totalorder %v957, 1
      %vm974 = vcmp.eq.s32.totalorder %v958, 1
      %vm975 = vcmp.eq.s32.totalorder %v959, 1
      %v976 = vsel %vm960, %v861, 0.0
      %v977 = vsel %vm961, %v862, 0.0
      %v978 = vsel %vm962, %v863, 0.0
      %v979 = vsel %vm963, %v864, 0.0
      %v980 = vsel %vm964, %v865, 0.0
      %v981 = vsel %vm965, %v866, 0.0
      %v982 = vsel %vm966, %v867, 0.0
      %v983 = vsel %vm967, %v868, 0.0
      %v984 = vsel %vm968, %v869, 0.0
      %v985 = vsel %vm969, %v870, 0.0
      %v986 = vsel %vm970, %v871, 0.0
      %v987 = vsel %vm971, %v872, 0.0
      %v988 = vsel %vm972, %v873, 0.0
      %v989 = vsel %vm973, %v874, 0.0
      %v990 = vsel %vm974, %v875, 0.0
      %v991 = vsel %vm975, %v876, 0.0
      %v992 = vadd.f32 %v976, %v977
      %v993 = vadd.f32 %v992, %v978
      %v994 = vadd.f32 %v993, %v979
      %v995 = vadd.f32 %v994, %v980
      %v996 = vadd.f32 %v995, %v981
      %v997 = vadd.f32 %v996, %v982
      %v998 = vadd.f32 %v997, %v983
      %v999 = vadd.f32 %v998, %v984
      %v1000 = vadd.f32 %v999, %v985
      %v1001 = vadd.f32 %v1000, %v986
      %v1002 = vadd.f32 %v1001, %v987
      %v1003 = vadd.f32 %v1002, %v988
      %v1004 = vadd.f32 %v1003, %v989
      %v1005 = vadd.f32 %v1004, %v990
      %v1006 = vadd.f32 %v1005, %v991
      %v1007 = vrot.slane %v1006, 4
      %v1008 = vadd.f32 %v1006, %v1007
      %v1009 = vrot.slane %v1008, 2
      %v1010 = vadd.f32 %v1008, %v1009
      %v1011 = vrot.slane %v1010, 1
      %v1012 = vadd.f32 %v1010, %v1011
      %v1013 = vmul.f32 %v976, %v976
      %v1014 = vmul.f32 %v977, %v977
      %v1015 = vmul.f32 %v978, %v978
      %v1016 = vmul.f32 %v979, %v979
      %v1017 = vmul.f32 %v980, %v980
      %v1018 = vmul.f32 %v981, %v981
      %v1019 = vmul.f32 %v982, %v982
      %v1020 = vmul.f32 %v983, %v983
      %v1021 = vmul.f32 %v984, %v984
      %v1022 = vmul.f32 %v985, %v985
      %v1023 = vmul.f32 %v986, %v986
      %v1024 = vmul.f32 %v987, %v987
      %v1025 = vmul.f32 %v988, %v988
      %v1026 = vmul.f32 %v989, %v989
      %v1027 = vmul.f32 %v990, %v990
      %v1028 = vmul.f32 %v991, %v991
      %v1029 = vadd.f32 %v1013, %v1014
      %v1030 = vadd.f32 %v1029, %v1015
      %v1031 = vadd.f32 %v1030, %v1016
      %v1032 = vadd.f32 %v1031, %v1017
      %v1033 = vadd.f32 %v1032, %v1018
      %v1034 = vadd.f32 %v1033, %v1019
      %v1035 = vadd.f32 %v1034, %v1020
      %v1036 = vadd.f32 %v1035, %v1021
      %v1037 = vadd.f32 %v1036, %v1022
      %v1038 = vadd.f32 %v1037, %v1023
      %v1039 = vadd.f32 %v1038, %v1024
      %v1040 = vadd.f32 %v1039, %v1025
      %v1041 = vadd.f32 %v1040, %v1026
      %v1042 = vadd.f32 %v1041, %v1027
      %v1043 = vadd.f32 %v1042, %v1028
      %v1044 = vrot.slane %v1043, 4
      %v1045 = vadd.f32 %v1043, %v1044
      %v1046 = vrot.slane %v1045, 2
      %v1047 = vadd.f32 %v1045, %v1046
      %v1048 = vrot.slane %v1047, 1
      %v1049 = vadd.f32 %v1047, %v1048
      %1050 = vst [vmem:[%s344] sm:$0x1] %v1012
      %1051 = vst [vmem:[%s347] sm:$0x1] %v1049
      %s1052 = smul.u32 16, %s20
      %p1053 = scmp.lt.s32.totalorder %s1052, 63
      %s1054 = scalar_select %p1053, %s1052, 63
      %s1055 = smul.addr %s1054, 8
      %s1056 = scalar_lea.vmem %s6, %s1055
      %p1057 = scmp.lt.s32.totalorder %s20, 3
      %s1058 = scalar_select %p1057, %s20, 3
      %s1059 = scalar_lea.vmem %s7, %s1058
      %p1060 = scmp.lt.s32.totalorder %s20, 3
      %s1061 = scalar_select %p1060, %s20, 3
      %s1062 = scalar_lea.vmem %s8, %s1061
      // Predicated region
      $region45: #{residual_block_forward.6} parent=43 // pred_check
        %p1063 = pneg %p174
      $region46: #{residual_block_forward.6} parent=43 // pred_check_branch
        %1065 = sbr.rel (%p1063) target = $region48
      $region47: #{residual_block_forward.6} parent=43 // pred_region
        %s1066 = smul.u32 16, %s20
      $region48: #{residual_block_forward.6} parent=43 // pred_fallthru
        _
      // Predicated region
      $region49: #{residual_block_forward.6} parent=43 // pred_check
        %p1067 = pneg %p200
      $region50: #{residual_block_forward.6} parent=43 // pred_check_branch
        %1069 = sbr.rel (%p1067) target = $region52
      $region51: #{residual_block_forward.6} parent=43 // pred_region
        _
      $region52: #{residual_block_forward.6} parent=43 // pred_fallthru
        _
      // Predicated region
      $region53: #{residual_block_forward.6} parent=43 // pred_check
        %p1070 = pneg %p226
      $region54: #{residual_block_forward.6} parent=43 // pred_check_branch
        %1072 = sbr.rel (%p1070) target = $region56
      $region55: #{residual_block_forward.6} parent=43 // pred_region
        _
      $region56: #{residual_block_forward.6} parent=43 // pred_fallthru
        _
    $region44: #{residual_block_forward.6} parent=5 // pred_fallthru
      _
    %p1073 = scmp.le.s32.totalorder 2, %s15
    // Predicated region
    $region57: #{residual_block_forward.6} parent=5 // pred_check
      %p1074 = pneg %p1073
    $region58: #{residual_block_forward.6} parent=5 // pred_check_branch
      %1076 = sbr.rel (%p1074) target = $region60
    $region59: #{residual_block_forward.6} parent=5 // pred_region
      %s1077 = ssub.s32 %s15, 2
      // Predicated region
      $region61: #{residual_block_forward.6} parent=59 // pred_check
        %p1078 = pneg %p180
      $region62: #{residual_block_forward.6} parent=59 // pred_check_branch
        %1080 = sbr.rel (%p1078) target = $region64
      $region63: #{residual_block_forward.6} parent=59 // pred_region
        %s1081 = smul.u32 16, %s21
        %p1082 = scmp.lt.s32.totalorder %s1081, 63
        %s1083 = scalar_select %p1082, %s1081, 63
        %s1084 = smul.addr %s1083, 8
        %s1085 = scalar_lea.vmem %s6, %s1084
      $region64: #{residual_block_forward.6} parent=59 // pred_fallthru
        _
      // Predicated region
      $region65: #{residual_block_forward.6} parent=59 // pred_check
        %p1086 = pneg %p206
      $region66: #{residual_block_forward.6} parent=59 // pred_check_branch
        %1088 = sbr.rel (%p1086) target = $region68
      $region67: #{residual_block_forward.6} parent=59 // pred_region
        %p1089 = scmp.lt.s32.totalorder %s21, 3
        %s1090 = scalar_select %p1089, %s21, 3
        %s1091 = scalar_lea.vmem %s7, %s1090
      $region68: #{residual_block_forward.6} parent=59 // pred_fallthru
        _
      // Predicated region
      $region69: #{residual_block_forward.6} parent=59 // pred_check
        %p1092 = pneg %p232
      $region70: #{residual_block_forward.6} parent=59 // pred_check_branch
        %1094 = sbr.rel (%p1092) target = $region72
      $region71: #{residual_block_forward.6} parent=59 // pred_region
        %p1095 = scmp.lt.s32.totalorder %s21, 3
        %s1096 = scalar_select %p1095, %s21, 3
        %s1097 = scalar_lea.vmem %s8, %s1096
      $region72: #{residual_block_forward.6} parent=59 // pred_fallthru
        _
    $region60: #{residual_block_forward.6} parent=5 // pred_fallthru
      _
  $region6: #{residual_block_forward.6} parent=0 // loop_footer
    %s19 = sadd.s32 1, %s15
  $region7: #{residual_block_forward.6} parent=0 // loop_footer_branch
    %14 = sbr.rel target = $region3
  $region8: #{residual_block_forward.6} parent=0 // loop_exit
    _

</llo_original>
